<compile_context>
chip_gen: v6e
topology: v6e:2x2x1
jax: 0.10.0
libtpu: 0.0.40
codegen_flags: <defaults>
</compile_context>

<pallas_src>
import functools

import numpy as np
import jax
import jax.numpy as jnp
from jax import lax
from jax.experimental import pallas as pl
from jax.experimental.pallas import tpu as pltpu


# ----------------------------------------------------------------------------
# Host-side compile-time constants: centered ("shifted") ortho inverse-DFT
# matrix, split into real / imag parts.
#   ifft2c = fftshift( G @ ifftshift(x) ) per axis
#     ->  Gc[i, j] = G[(i - n//2) % n, (j + (n+1)//2) % n]
# The centered FORWARD DFT is the elementwise conjugate: (Gr, -Gi).
# ----------------------------------------------------------------------------
@functools.lru_cache(maxsize=None)
def _centered_idft_np(n: int):
    k = np.arange(n, dtype=np.float64)
    ang = 2.0 * np.pi * np.outer(k, k) / n          # inverse-transform sign (+)
    scale = 1.0 / np.sqrt(n)                        # 'ortho' norm per axis
    gr = np.cos(ang) * scale
    gi = np.sin(ang) * scale
    sf, si = n // 2, (n + 1) // 2                   # fftshift rows / ifftshift cols
    gr = np.roll(np.roll(gr, sf, axis=0), -si, axis=1)
    gi = np.roll(np.roll(gi, sf, axis=0), -si, axis=1)
    return gr.astype(np.float32), gi.astype(np.float32)


# ----------------------------------------------------------------------------
# Kernel factory (B, H, W, use_roll are trace-time Python constants)
# ----------------------------------------------------------------------------
def _build_kernel(B: int, H: int, W: int, use_roll: bool):
    f32 = jnp.float32
    bf16 = jnp.bfloat16
    HH = 2 * H

    def kernel(x_ref,                      # (B, 2, H, W)           VMEM f32
               grh_ref, gih_ref,           # (H, H)  centered IDFT  VMEM bf16
               grwt_ref, giwt_ref,         # (W, W)  centered IDFT^T VMEM bf16
               w_ref, b_ref,               # (36,), (2,)            SMEM f32
               o_ref,                      # (B, 2, H, W)           VMEM f32
               sc_ref):                    # (B*2H, W)              VMEM f32 scratch
        grh = grh_ref[...]
        gih = gih_ref[...]
        grwt = grwt_ref[...]
        giwt = giwt_ref[...]

        # ---- centered IFFT2, row (H) transform: 4 bf16 MXU dots per image ---
        # T = (Gr + i*Gi) @ (Xr + i*Xi) ; [Tr; Ti] written into scratch halves.
        for b in range(B):
            r0 = b * HH
            xr = x_ref[b, 0].astype(bf16)
            xi = x_ref[b, 1].astype(bf16)
            sc_ref[r0:r0 + H, :] = (
                jnp.dot(grh, xr, preferred_element_type=f32)
                - jnp.dot(gih, xi, preferred_element_type=f32))
            sc_ref[r0 + H:r0 + HH, :] = (
                jnp.dot(grh, xi, preferred_element_type=f32)
                + jnp.dot(gih, xr, preferred_element_type=f32))

        # ---- centered IFFT2, column (W) transform: batched over the block ---
        ts = sc_ref[...].astype(bf16)                              # (B*2H, W)
        pr = jnp.dot(ts, grwt, preferred_element_type=f32)         # T* @ GrW^T
        pi = jnp.dot(ts, giwt, preferred_element_type=f32)         # T* @ GiW^T

        # ---- Conv2d(2, 2, 3, padding=1): VPU/XLU only -----------------------
        # NOTE: MACs kept in f32 so the same kernel is valid on v5e (no bf16
        # VALU); on v6e/v7x a bf16 variant would roughly double VPU throughput.
        zrow = jnp.zeros((1, W), f32)
        if use_roll:
            col = lax.broadcasted_iota(jnp.int32, (H, W), 1)
            keep_for_pos = col < (W - 1)        # valid lanes for dw = +1
            keep_for_neg = col > 0              # valid lanes for dw = -1
            zcol = None
        else:
            keep_for_pos = keep_for_neg = None
            zcol = jnp.zeros((H, 1), f32)

        def shift_rows(img, dh):                # s[h, :] = img[h+dh, :] (0-pad)
            if dh == 0:
                return img
            if dh > 0:
                return jnp.concatenate([img[dh:, :], zrow], axis=0)
            return jnp.concatenate([zrow, img[:dh, :]], axis=0)

        def shift_cols(img, dw):                # s[:, w] = img[:, w+dw] (0-pad)
            if dw == 0:
                return img
            if use_roll:
                rolled = pltpu.roll(img, shift=-dw, axis=1)
                return jnp.where(keep_for_pos if dw > 0 else keep_for_neg,
                                 rolled, 0.0)
            if dw > 0:
                return jnp.concatenate([img[:, dw:], zcol], axis=1)
            return jnp.concatenate([zcol, img[:, :dw]], axis=1)

        for b in range(B):
            r0 = b * HH
            # Im = T @ (GrW^T + i*GiW^T)
            im = (pr[r0:r0 + H, :] - pi[r0 + H:r0 + HH, :],        # real
                  pi[r0:r0 + H, :] + pr[r0 + H:r0 + HH, :])        # imag
            # two partial accumulators per out-channel -> shorter add chains
            a00 = jnp.zeros((H, W), f32)
            a01 = jnp.zeros((H, W), f32)
            a10 = jnp.zeros((H, W), f32)
            a11 = jnp.zeros((H, W), f32)
            for ci in range(2):
                for dh in (-1, 0, 1):
                    rsh = shift_rows(im[ci], dh)
                    for dw in (-1, 0, 1):
                        s = shift_cols(rsh, dw)
                        k = ci * 9 + (dh + 1) * 3 + (dw + 1)       # OIHW flat
                        if ci == 0:
                            a00 = a00 + w_ref[k] * s
                            a10 = a10 + w_ref[18 + k] * s
                        else:
                            a01 = a01 + w_ref[k] * s
                            a11 = a11 + w_ref[18 + k] * s
            sc_ref[r0:r0 + H, :] = a00 + a01 + b_ref[0]            # out ch 0
            sc_ref[r0 + H:r0 + HH, :] = a10 + a11 + b_ref[1]       # out ch 1

        # ---- centered FFT2, row transform (conjugate matrices: Gr, -Gi) -----
        # V = (Gr - i*Gi) @ (Cr + i*Ci)
        for b in range(B):
            r0 = b * HH
            c_re = sc_ref[r0:r0 + H, :].astype(bf16)
            c_im = sc_ref[r0 + H:r0 + HH, :].astype(bf16)
            sc_ref[r0:r0 + H, :] = (
                jnp.dot(grh, c_re, preferred_element_type=f32)
                + jnp.dot(gih, c_im, preferred_element_type=f32))
            sc_ref[r0 + H:r0 + HH, :] = (
                jnp.dot(grh, c_im, preferred_element_type=f32)
                - jnp.dot(gih, c_re, preferred_element_type=f32))

        # ---- centered FFT2, column transform + direct output stores ---------
        vs = sc_ref[...].astype(bf16)                              # [Vr; Vi]
        qr = jnp.dot(vs, grwt, preferred_element_type=f32)
        qi = jnp.dot(vs, giwt, preferred_element_type=f32)
        for b in range(B):
            r0 = b * HH
            # Y = V @ (GrW^T - i*GiW^T)
            o_ref[b, 0] = qr[r0:r0 + H, :] + qi[r0 + H:r0 + HH, :]
            o_ref[b, 1] = qr[r0 + H:r0 + HH, :] - qi[r0:r0 + H, :]

    return kernel


# ----------------------------------------------------------------------------
# Wrapper helpers
# ----------------------------------------------------------------------------
def _vmem_limit_bytes() -> int:
    mib = 1024 * 1024
    try:
        cap = int(pltpu.get_tpu_info().vmem_capacity_bytes)
    except Exception:
        cap = 64 * mib                      # conservative (v7x-sized) fallback
    # leave ~8 MiB for Mosaic-internal scratch; never request the whole chip.
    return int(max(16 * mib, min(cap - 8 * mib, 112 * mib)))


def _pick_batch_block(n: int) -> int:
    # A few images per grid step amortize per-step overhead and fill the MXU,
    # but keep >=2 grid steps when possible so the "parallel" megacore split
    # over the batch axis can actually engage (v7x).
    for cand in (4, 3, 2):
        if n % cand == 0 and n // cand >= 2:
            return cand
    for cand in (2, 3):
        if n % cand == 0:
            return cand
    return 1


# ----------------------------------------------------------------------------
# Public entry point
# ----------------------------------------------------------------------------
@functools.partial(jax.jit, static_argnames=("batch_block",))
def fft_nn_wrapper(x, conv_w, conv_b, *, batch_block=None):
    N, C, H, W = x.shape
    assert C == 2, "channel dim must hold (real, imag)"
    B = batch_block if batch_block is not None else _pick_batch_block(N)
    assert N % B == 0, "batch_block must divide N"
    HH = 2 * H

    # Host-built numpy constants, shipped in bf16 (no device trig, half DMA).
    grh_np, gih_np = _centered_idft_np(H)
    grw_np, giw_np = _centered_idft_np(W)
    grh = jnp.asarray(grh_np, dtype=jnp.bfloat16)
    gih = jnp.asarray(gih_np, dtype=jnp.bfloat16)
    grwt = jnp.asarray(np.ascontiguousarray(grw_np.T), dtype=jnp.bfloat16)
    giwt = jnp.asarray(np.ascontiguousarray(giw_np.T), dtype=jnp.bfloat16)

    w_flat = conv_w.reshape(-1).astype(jnp.float32)   # (2*2*3*3,) = (36,)
    b_flat = conv_b.astype(jnp.float32)               # (2,)

    # Grid-invariant constants: single-buffered (no pointless double buffer).
    const_h = pl.BlockSpec((H, H), lambda n: (0, 0),
                           pipeline_mode=pl.Buffered(1))
    const_w = pl.BlockSpec((W, W), lambda n: (0, 0),
                           pipeline_mode=pl.Buffered(1))
    smem = pl.BlockSpec(memory_space=pltpu.MemorySpace.SMEM)

    kernel = _build_kernel(B, H, W, use_roll=(W % 128 == 0))

    return pl.pallas_call(
        kernel,
        out_shape=jax.ShapeDtypeStruct((N, 2, H, W), jnp.float32),
        grid_spec=pltpu.PrefetchScalarGridSpec(
            num_scalar_prefetch=0,
            grid=(N // B,),
            in_specs=[
                pl.BlockSpec((B, 2, H, W), lambda n: (n, 0, 0, 0)),
                const_h, const_h,          # GrH, GiH   (centered IDFT, rows)
                const_w, const_w,          # GrW^T, GiW^T (centered IDFT, cols)
                smem, smem,                # conv weight / bias scalars
            ],
            out_specs=pl.BlockSpec((B, 2, H, W), lambda n: (n, 0, 0, 0)),
            scratch_shapes=[pltpu.VMEM((B * HH, W), jnp.float32)],
        ),
        compiler_params=pltpu.CompilerParams(
            dimension_semantics=("parallel",),     # batch elems are independent
            vmem_limit_bytes=_vmem_limit_bytes(),
        ),
    )(x.astype(jnp.float32), grh, gih, grwt, giwt, w_flat, b_flat)


# ----------------------------------------------------------------------------
# Pure-JAX reference (jnp.fft + lax.conv), for a sanity check.
# ----------------------------------------------------------------------------
def ref_forward(x, conv_w, conv_b):
    xc = x[:, 0] + 1j * x[:, 1]                                # (N, H, W) complex
    c = jnp.fft.ifftshift(xc, axes=(-2, -1))
    c = jnp.fft.ifft2(c, norm="ortho")
    c = jnp.fft.fftshift(c, axes=(-2, -1))
    im = jnp.stack([c.real, c.imag], axis=1).astype(jnp.float32)

    out = jax.lax.conv_general_dilated(
        im, conv_w, window_strides=(1, 1), padding="SAME",
        dimension_numbers=("NCHW", "OIHW", "NCHW"),
        precision=jax.lax.Precision.HIGHEST)
    out = out + conv_b[None, :, None, None]

    oc = out[:, 0] + 1j * out[:, 1]
    c2 = jnp.fft.ifftshift(oc, axes=(-2, -1))
    c2 = jnp.fft.fft2(c2, norm="ortho")
    c2 = jnp.fft.fftshift(c2, axes=(-2, -1))
    return jnp.stack([c2.real, c2.imag], axis=1).astype(jnp.float32)


if __name__ == "__main__":
    key = jax.random.PRNGKey(0)
    k_x, k_w, k_b = jax.random.split(key, 3)

    N, C, H, W = 2, 2, 16, 16
    x = jax.random.normal(k_x, (N, C, H, W), dtype=jnp.float32)

    # deterministic synthetic params for the inner model: Conv2d(2, 2, 3, pad=1)
    conv_w = 0.1 * jax.random.normal(k_w, (2, 2, 3, 3), dtype=jnp.float32)
    conv_b = 0.1 * jax.random.normal(k_b, (2,), dtype=jnp.float32)

    y = fft_nn_wrapper(x, conv_w, conv_b)
    y = jax.block_until_ready(y)

    y_ref = ref_forward(x, conv_w, conv_b)
    assert y.shape == (N, 2, H, W)
    assert bool(jnp.all(jnp.isfinite(y)))
    # bf16 constants + single-pass MXU path: error well inside this margin at
    # these sizes (validate larger fastMRI sizes separately; if marginal, use
    # f32 constants / HIGH precision on the forward-FFT pair only).
    assert bool(jnp.allclose(y, y_ref, rtol=5e-2, atol=5e-2)), \
        "mismatch vs jnp.fft reference"

    print("KERNEL_OK")
</pallas_src>

<mosaic_0001>
module attributes {stable_mosaic.version = 11 : i64} {
  func.func @kernel(%arg0: i32, %arg1: memref<2x2x16x16xf32, #tpu.memory_space<vmem>>, %arg2: memref<16x16xbf16, #tpu.memory_space<vmem>>, %arg3: memref<16x16xbf16, #tpu.memory_space<vmem>>, %arg4: memref<16x16xbf16, #tpu.memory_space<vmem>>, %arg5: memref<16x16xbf16, #tpu.memory_space<vmem>>, %arg6: memref<36xf32, #tpu.memory_space<smem>>, %arg7: memref<2xf32, #tpu.memory_space<smem>>, %arg8: memref<2x2x16x16xf32, #tpu.memory_space<vmem>>, %arg9: memref<64x16xf32, #tpu.memory_space<vmem>>) attributes {dimension_semantics = [#tpu.dimension_semantics<parallel>], iteration_bounds = array<i64: 1>, scalar_prefetch = 0 : i64, scratch_operands = 1 : i64, tpu.core_type = #tpu.core_type<tc>, window_params = [{transform_indices = @transform_0, window_bounds = array<i64: 2, 2, 16, 16>}, {pipeline_mode = #tpu.pipeline_mode<synchronous>, transform_indices = @transform_1, window_bounds = array<i64: 16, 16>}, {pipeline_mode = #tpu.pipeline_mode<synchronous>, transform_indices = @transform_2, window_bounds = array<i64: 16, 16>}, {pipeline_mode = #tpu.pipeline_mode<synchronous>, transform_indices = @transform_3, window_bounds = array<i64: 16, 16>}, {pipeline_mode = #tpu.pipeline_mode<synchronous>, transform_indices = @transform_4, window_bounds = array<i64: 16, 16>}, {transform_indices = @transform_5, window_bounds = array<i64: 36>}, {transform_indices = @transform_6, window_bounds = array<i64: 2>}, {transform_indices = @transform_7, window_bounds = array<i64: 2, 2, 16, 16>}]} {
    %c0 = arith.constant 0 : index
    %c0_0 = arith.constant 0 : index
    %0 = vector.load %arg2[%c0, %c0_0] : memref<16x16xbf16, #tpu.memory_space<vmem>>, vector<16x16xbf16>
    %c0_1 = arith.constant 0 : index
    %c0_2 = arith.constant 0 : index
    %1 = vector.load %arg3[%c0_1, %c0_2] : memref<16x16xbf16, #tpu.memory_space<vmem>>, vector<16x16xbf16>
    %c0_3 = arith.constant 0 : index
    %c0_4 = arith.constant 0 : index
    %2 = vector.load %arg4[%c0_3, %c0_4] : memref<16x16xbf16, #tpu.memory_space<vmem>>, vector<16x16xbf16>
    %c0_5 = arith.constant 0 : index
    %c0_6 = arith.constant 0 : index
    %3 = vector.load %arg5[%c0_5, %c0_6] : memref<16x16xbf16, #tpu.memory_space<vmem>>, vector<16x16xbf16>
    %c0_7 = arith.constant 0 : index
    %c0_8 = arith.constant 0 : index
    %c0_9 = arith.constant 0 : index
    %c0_10 = arith.constant 0 : index
    %4 = vector.load %arg1[%c0_7, %c0_8, %c0_9, %c0_10] : memref<2x2x16x16xf32, #tpu.memory_space<vmem>>, vector<1x1x16x16xf32>
    %5 = vector.shape_cast %4 : vector<1x1x16x16xf32> to vector<16x16xf32>
    %6 = arith.truncf %5 : vector<16x16xf32> to vector<16x16xbf16>
    %c0_11 = arith.constant 0 : index
    %c1 = arith.constant 1 : index
    %c0_12 = arith.constant 0 : index
    %c0_13 = arith.constant 0 : index
    %7 = vector.load %arg1[%c0_11, %c1, %c0_12, %c0_13] : memref<2x2x16x16xf32, #tpu.memory_space<vmem>>, vector<1x1x16x16xf32>
    %8 = vector.shape_cast %7 : vector<1x1x16x16xf32> to vector<16x16xf32>
    %9 = arith.truncf %8 : vector<16x16xf32> to vector<16x16xbf16>
    %cst = arith.constant dense<0.000000e+00> : vector<16x16xf32>
    %10 = tpu.matmul %0, %6, %cst {dimension_numbers = #tpu.dot_dimension_numbers<[1], [0], [0], [1], [0, 0, 1, 1], [], []>} : vector<16x16xbf16>, vector<16x16xbf16>, vector<16x16xf32> -> vector<16x16xf32>
    %cst_14 = arith.constant dense<0.000000e+00> : vector<16x16xf32>
    %11 = tpu.matmul %1, %9, %cst_14 {dimension_numbers = #tpu.dot_dimension_numbers<[1], [0], [0], [1], [0, 0, 1, 1], [], []>} : vector<16x16xbf16>, vector<16x16xbf16>, vector<16x16xf32> -> vector<16x16xf32>
    %12 = arith.subf %10, %11 : vector<16x16xf32>
    %c0_15 = arith.constant 0 : index
    %c0_16 = arith.constant 0 : index
    %13 = vector.load %arg9[%c0_15, %c0_16] : memref<64x16xf32, #tpu.memory_space<vmem>>, vector<16x16xf32>
    tpu.vector_store %arg9[%c0_15, %c0_16], %12 {strides = array<i32>} : memref<64x16xf32, #tpu.memory_space<vmem>>, vector<16x16xf32>,
    %cst_17 = arith.constant dense<0.000000e+00> : vector<16x16xf32>
    %14 = tpu.matmul %0, %9, %cst_17 {dimension_numbers = #tpu.dot_dimension_numbers<[1], [0], [0], [1], [0, 0, 1, 1], [], []>} : vector<16x16xbf16>, vector<16x16xbf16>, vector<16x16xf32> -> vector<16x16xf32>
    %cst_18 = arith.constant dense<0.000000e+00> : vector<16x16xf32>
    %15 = tpu.matmul %1, %6, %cst_18 {dimension_numbers = #tpu.dot_dimension_numbers<[1], [0], [0], [1], [0, 0, 1, 1], [], []>} : vector<16x16xbf16>, vector<16x16xbf16>, vector<16x16xf32> -> vector<16x16xf32>
    %16 = arith.addf %14, %15 : vector<16x16xf32>
    %c16 = arith.constant 16 : index
    %c0_19 = arith.constant 0 : index
    %17 = vector.load %arg9[%c16, %c0_19] : memref<64x16xf32, #tpu.memory_space<vmem>>, vector<16x16xf32>
    tpu.vector_store %arg9[%c16, %c0_19], %16 {strides = array<i32>} : memref<64x16xf32, #tpu.memory_space<vmem>>, vector<16x16xf32>,
    %c1_20 = arith.constant 1 : index
    %c0_21 = arith.constant 0 : index
    %c0_22 = arith.constant 0 : index
    %c0_23 = arith.constant 0 : index
    %18 = vector.load %arg1[%c1_20, %c0_21, %c0_22, %c0_23] : memref<2x2x16x16xf32, #tpu.memory_space<vmem>>, vector<1x1x16x16xf32>
    %19 = vector.shape_cast %18 : vector<1x1x16x16xf32> to vector<16x16xf32>
    %20 = arith.truncf %19 : vector<16x16xf32> to vector<16x16xbf16>
    %c1_24 = arith.constant 1 : index
    %c1_25 = arith.constant 1 : index
    %c0_26 = arith.constant 0 : index
    %c0_27 = arith.constant 0 : index
    %21 = vector.load %arg1[%c1_24, %c1_25, %c0_26, %c0_27] : memref<2x2x16x16xf32, #tpu.memory_space<vmem>>, vector<1x1x16x16xf32>
    %22 = vector.shape_cast %21 : vector<1x1x16x16xf32> to vector<16x16xf32>
    %23 = arith.truncf %22 : vector<16x16xf32> to vector<16x16xbf16>
    %cst_28 = arith.constant dense<0.000000e+00> : vector<16x16xf32>
    %24 = tpu.matmul %0, %20, %cst_28 {dimension_numbers = #tpu.dot_dimension_numbers<[1], [0], [0], [1], [0, 0, 1, 1], [], []>} : vector<16x16xbf16>, vector<16x16xbf16>, vector<16x16xf32> -> vector<16x16xf32>
    %cst_29 = arith.constant dense<0.000000e+00> : vector<16x16xf32>
    %25 = tpu.matmul %1, %23, %cst_29 {dimension_numbers = #tpu.dot_dimension_numbers<[1], [0], [0], [1], [0, 0, 1, 1], [], []>} : vector<16x16xbf16>, vector<16x16xbf16>, vector<16x16xf32> -> vector<16x16xf32>
    %26 = arith.subf %24, %25 : vector<16x16xf32>
    %c32 = arith.constant 32 : index
    %c0_30 = arith.constant 0 : index
    %27 = vector.load %arg9[%c32, %c0_30] : memref<64x16xf32, #tpu.memory_space<vmem>>, vector<16x16xf32>
    tpu.vector_store %arg9[%c32, %c0_30], %26 {strides = array<i32>} : memref<64x16xf32, #tpu.memory_space<vmem>>, vector<16x16xf32>,
    %cst_31 = arith.constant dense<0.000000e+00> : vector<16x16xf32>
    %28 = tpu.matmul %0, %23, %cst_31 {dimension_numbers = #tpu.dot_dimension_numbers<[1], [0], [0], [1], [0, 0, 1, 1], [], []>} : vector<16x16xbf16>, vector<16x16xbf16>, vector<16x16xf32> -> vector<16x16xf32>
    %cst_32 = arith.constant dense<0.000000e+00> : vector<16x16xf32>
    %29 = tpu.matmul %1, %20, %cst_32 {dimension_numbers = #tpu.dot_dimension_numbers<[1], [0], [0], [1], [0, 0, 1, 1], [], []>} : vector<16x16xbf16>, vector<16x16xbf16>, vector<16x16xf32> -> vector<16x16xf32>
    %30 = arith.addf %28, %29 : vector<16x16xf32>
    %c48 = arith.constant 48 : index
    %c0_33 = arith.constant 0 : index
    %31 = vector.load %arg9[%c48, %c0_33] : memref<64x16xf32, #tpu.memory_space<vmem>>, vector<16x16xf32>
    tpu.vector_store %arg9[%c48, %c0_33], %30 {strides = array<i32>} : memref<64x16xf32, #tpu.memory_space<vmem>>, vector<16x16xf32>,
    %c0_34 = arith.constant 0 : index
    %c0_35 = arith.constant 0 : index
    %32 = vector.load %arg9[%c0_34, %c0_35] : memref<64x16xf32, #tpu.memory_space<vmem>>, vector<64x16xf32>
    %33 = arith.truncf %32 : vector<64x16xf32> to vector<64x16xbf16>
    %cst_36 = arith.constant dense<0.000000e+00> : vector<64x16xf32>
    %34 = tpu.matmul %33, %2, %cst_36 {dimension_numbers = #tpu.dot_dimension_numbers<[1], [0], [0], [1], [0, 0, 1, 1], [], []>} : vector<64x16xbf16>, vector<16x16xbf16>, vector<64x16xf32> -> vector<64x16xf32>
    %cst_37 = arith.constant dense<0.000000e+00> : vector<64x16xf32>
    %35 = tpu.matmul %33, %3, %cst_37 {dimension_numbers = #tpu.dot_dimension_numbers<[1], [0], [0], [1], [0, 0, 1, 1], [], []>} : vector<64x16xbf16>, vector<16x16xbf16>, vector<64x16xf32> -> vector<64x16xf32>
    %cst_38 = arith.constant 0.000000e+00 : f32
    %36 = vector.broadcast %cst_38 : f32 to vector<1x16xf32>
    %cst_39 = arith.constant 0.000000e+00 : f32
    %37 = vector.broadcast %cst_39 : f32 to vector<16x1xf32>
    %38 = vector.extract_strided_slice %34 {offsets = [0, 0], sizes = [16, 16], strides = [1, 1]} : vector<64x16xf32> to vector<16x16xf32>
    %39 = vector.extract_strided_slice %35 {offsets = [16, 0], sizes = [16, 16], strides = [1, 1]} : vector<64x16xf32> to vector<16x16xf32>
    %40 = arith.subf %38, %39 : vector<16x16xf32>
    %41 = vector.extract_strided_slice %35 {offsets = [0, 0], sizes = [16, 16], strides = [1, 1]} : vector<64x16xf32> to vector<16x16xf32>
    %42 = vector.extract_strided_slice %34 {offsets = [16, 0], sizes = [16, 16], strides = [1, 1]} : vector<64x16xf32> to vector<16x16xf32>
    %43 = arith.addf %41, %42 : vector<16x16xf32>
    %cst_40 = arith.constant 0.000000e+00 : f32
    %44 = vector.broadcast %cst_40 : f32 to vector<16x16xf32>
    %cst_41 = arith.constant 0.000000e+00 : f32
    %45 = vector.broadcast %cst_41 : f32 to vector<16x16xf32>
    %cst_42 = arith.constant 0.000000e+00 : f32
    %46 = vector.broadcast %cst_42 : f32 to vector<16x16xf32>
    %cst_43 = arith.constant 0.000000e+00 : f32
    %47 = vector.broadcast %cst_43 : f32 to vector<16x16xf32>
    %48 = vector.extract_strided_slice %40 {offsets = [0, 0], sizes = [15, 16], strides = [1, 1]} : vector<16x16xf32> to vector<15x16xf32>
    %49 = tpu.concatenate %36, %48 in 0 : vector<1x16xf32>, vector<15x16xf32> -> vector<16x16xf32>
    %50 = vector.extract_strided_slice %49 {offsets = [0, 0], sizes = [16, 15], strides = [1, 1]} : vector<16x16xf32> to vector<16x15xf32>
    %51 = tpu.concatenate %37, %50 in 1 : vector<16x1xf32>, vector<16x15xf32> -> vector<16x16xf32>
    %c0_44 = arith.constant 0 : index
    %52 = memref.load %arg6[%c0_44] : memref<36xf32, #tpu.memory_space<smem>>
    %53 = vector.broadcast %52 : f32 to vector<16x16xf32>
    %54 = arith.mulf %53, %51 : vector<16x16xf32>
    %55 = arith.addf %44, %54 : vector<16x16xf32>
    %c18 = arith.constant 18 : index
    %56 = memref.load %arg6[%c18] : memref<36xf32, #tpu.memory_space<smem>>
    %57 = vector.broadcast %56 : f32 to vector<16x16xf32>
    %58 = arith.mulf %57, %51 : vector<16x16xf32>
    %59 = arith.addf %46, %58 : vector<16x16xf32>
    %c1_45 = arith.constant 1 : index
    %60 = memref.load %arg6[%c1_45] : memref<36xf32, #tpu.memory_space<smem>>
    %61 = vector.broadcast %60 : f32 to vector<16x16xf32>
    %62 = arith.mulf %61, %49 : vector<16x16xf32>
    %63 = arith.addf %55, %62 : vector<16x16xf32>
    %c19 = arith.constant 19 : index
    %64 = memref.load %arg6[%c19] : memref<36xf32, #tpu.memory_space<smem>>
    %65 = vector.broadcast %64 : f32 to vector<16x16xf32>
    %66 = arith.mulf %65, %49 : vector<16x16xf32>
    %67 = arith.addf %59, %66 : vector<16x16xf32>
    %68 = vector.extract_strided_slice %49 {offsets = [0, 1], sizes = [16, 15], strides = [1, 1]} : vector<16x16xf32> to vector<16x15xf32>
    %69 = tpu.concatenate %68, %37 in 1 : vector<16x15xf32>, vector<16x1xf32> -> vector<16x16xf32>
    %c2 = arith.constant 2 : index
    %70 = memref.load %arg6[%c2] : memref<36xf32, #tpu.memory_space<smem>>
    %71 = vector.broadcast %70 : f32 to vector<16x16xf32>
    %72 = arith.mulf %71, %69 : vector<16x16xf32>
    %73 = arith.addf %63, %72 : vector<16x16xf32>
    %c20 = arith.constant 20 : index
    %74 = memref.load %arg6[%c20] : memref<36xf32, #tpu.memory_space<smem>>
    %75 = vector.broadcast %74 : f32 to vector<16x16xf32>
    %76 = arith.mulf %75, %69 : vector<16x16xf32>
    %77 = arith.addf %67, %76 : vector<16x16xf32>
    %78 = vector.extract_strided_slice %40 {offsets = [0, 0], sizes = [16, 15], strides = [1, 1]} : vector<16x16xf32> to vector<16x15xf32>
    %79 = tpu.concatenate %37, %78 in 1 : vector<16x1xf32>, vector<16x15xf32> -> vector<16x16xf32>
    %c3 = arith.constant 3 : index
    %80 = memref.load %arg6[%c3] : memref<36xf32, #tpu.memory_space<smem>>
    %81 = vector.broadcast %80 : f32 to vector<16x16xf32>
    %82 = arith.mulf %81, %79 : vector<16x16xf32>
    %83 = arith.addf %73, %82 : vector<16x16xf32>
    %c21 = arith.constant 21 : index
    %84 = memref.load %arg6[%c21] : memref<36xf32, #tpu.memory_space<smem>>
    %85 = vector.broadcast %84 : f32 to vector<16x16xf32>
    %86 = arith.mulf %85, %79 : vector<16x16xf32>
    %87 = arith.addf %77, %86 : vector<16x16xf32>
    %c4 = arith.constant 4 : index
    %88 = memref.load %arg6[%c4] : memref<36xf32, #tpu.memory_space<smem>>
    %89 = vector.broadcast %88 : f32 to vector<16x16xf32>
    %90 = arith.mulf %89, %40 : vector<16x16xf32>
    %91 = arith.addf %83, %90 : vector<16x16xf32>
    %c22 = arith.constant 22 : index
    %92 = memref.load %arg6[%c22] : memref<36xf32, #tpu.memory_space<smem>>
    %93 = vector.broadcast %92 : f32 to vector<16x16xf32>
    %94 = arith.mulf %93, %40 : vector<16x16xf32>
    %95 = arith.addf %87, %94 : vector<16x16xf32>
    %96 = vector.extract_strided_slice %40 {offsets = [0, 1], sizes = [16, 15], strides = [1, 1]} : vector<16x16xf32> to vector<16x15xf32>
    %97 = tpu.concatenate %96, %37 in 1 : vector<16x15xf32>, vector<16x1xf32> -> vector<16x16xf32>
    %c5 = arith.constant 5 : index
    %98 = memref.load %arg6[%c5] : memref<36xf32, #tpu.memory_space<smem>>
    %99 = vector.broadcast %98 : f32 to vector<16x16xf32>
    %100 = arith.mulf %99, %97 : vector<16x16xf32>
    %101 = arith.addf %91, %100 : vector<16x16xf32>
    %c23 = arith.constant 23 : index
    %102 = memref.load %arg6[%c23] : memref<36xf32, #tpu.memory_space<smem>>
    %103 = vector.broadcast %102 : f32 to vector<16x16xf32>
    %104 = arith.mulf %103, %97 : vector<16x16xf32>
    %105 = arith.addf %95, %104 : vector<16x16xf32>
    %106 = vector.extract_strided_slice %40 {offsets = [1, 0], sizes = [15, 16], strides = [1, 1]} : vector<16x16xf32> to vector<15x16xf32>
    %107 = tpu.concatenate %106, %36 in 0 : vector<15x16xf32>, vector<1x16xf32> -> vector<16x16xf32>
    %108 = vector.extract_strided_slice %107 {offsets = [0, 0], sizes = [16, 15], strides = [1, 1]} : vector<16x16xf32> to vector<16x15xf32>
    %109 = tpu.concatenate %37, %108 in 1 : vector<16x1xf32>, vector<16x15xf32> -> vector<16x16xf32>
    %c6 = arith.constant 6 : index
    %110 = memref.load %arg6[%c6] : memref<36xf32, #tpu.memory_space<smem>>
    %111 = vector.broadcast %110 : f32 to vector<16x16xf32>
    %112 = arith.mulf %111, %109 : vector<16x16xf32>
    %113 = arith.addf %101, %112 : vector<16x16xf32>
    %c24 = arith.constant 24 : index
    %114 = memref.load %arg6[%c24] : memref<36xf32, #tpu.memory_space<smem>>
    %115 = vector.broadcast %114 : f32 to vector<16x16xf32>
    %116 = arith.mulf %115, %109 : vector<16x16xf32>
    %117 = arith.addf %105, %116 : vector<16x16xf32>
    %c7 = arith.constant 7 : index
    %118 = memref.load %arg6[%c7] : memref<36xf32, #tpu.memory_space<smem>>
    %119 = vector.broadcast %118 : f32 to vector<16x16xf32>
    %120 = arith.mulf %119, %107 : vector<16x16xf32>
    %121 = arith.addf %113, %120 : vector<16x16xf32>
    %c25 = arith.constant 25 : index
    %122 = memref.load %arg6[%c25] : memref<36xf32, #tpu.memory_space<smem>>
    %123 = vector.broadcast %122 : f32 to vector<16x16xf32>
    %124 = arith.mulf %123, %107 : vector<16x16xf32>
    %125 = arith.addf %117, %124 : vector<16x16xf32>
    %126 = vector.extract_strided_slice %107 {offsets = [0, 1], sizes = [16, 15], strides = [1, 1]} : vector<16x16xf32> to vector<16x15xf32>
    %127 = tpu.concatenate %126, %37 in 1 : vector<16x15xf32>, vector<16x1xf32> -> vector<16x16xf32>
    %c8 = arith.constant 8 : index
    %128 = memref.load %arg6[%c8] : memref<36xf32, #tpu.memory_space<smem>>
    %129 = vector.broadcast %128 : f32 to vector<16x16xf32>
    %130 = arith.mulf %129, %127 : vector<16x16xf32>
    %131 = arith.addf %121, %130 : vector<16x16xf32>
    %c26 = arith.constant 26 : index
    %132 = memref.load %arg6[%c26] : memref<36xf32, #tpu.memory_space<smem>>
    %133 = vector.broadcast %132 : f32 to vector<16x16xf32>
    %134 = arith.mulf %133, %127 : vector<16x16xf32>
    %135 = arith.addf %125, %134 : vector<16x16xf32>
    %136 = vector.extract_strided_slice %43 {offsets = [0, 0], sizes = [15, 16], strides = [1, 1]} : vector<16x16xf32> to vector<15x16xf32>
    %137 = tpu.concatenate %36, %136 in 0 : vector<1x16xf32>, vector<15x16xf32> -> vector<16x16xf32>
    %138 = vector.extract_strided_slice %137 {offsets = [0, 0], sizes = [16, 15], strides = [1, 1]} : vector<16x16xf32> to vector<16x15xf32>
    %139 = tpu.concatenate %37, %138 in 1 : vector<16x1xf32>, vector<16x15xf32> -> vector<16x16xf32>
    %c9 = arith.constant 9 : index
    %140 = memref.load %arg6[%c9] : memref<36xf32, #tpu.memory_space<smem>>
    %141 = vector.broadcast %140 : f32 to vector<16x16xf32>
    %142 = arith.mulf %141, %139 : vector<16x16xf32>
    %143 = arith.addf %45, %142 : vector<16x16xf32>
    %c27 = arith.constant 27 : index
    %144 = memref.load %arg6[%c27] : memref<36xf32, #tpu.memory_space<smem>>
    %145 = vector.broadcast %144 : f32 to vector<16x16xf32>
    %146 = arith.mulf %145, %139 : vector<16x16xf32>
    %147 = arith.addf %47, %146 : vector<16x16xf32>
    %c10 = arith.constant 10 : index
    %148 = memref.load %arg6[%c10] : memref<36xf32, #tpu.memory_space<smem>>
    %149 = vector.broadcast %148 : f32 to vector<16x16xf32>
    %150 = arith.mulf %149, %137 : vector<16x16xf32>
    %151 = arith.addf %143, %150 : vector<16x16xf32>
    %c28 = arith.constant 28 : index
    %152 = memref.load %arg6[%c28] : memref<36xf32, #tpu.memory_space<smem>>
    %153 = vector.broadcast %152 : f32 to vector<16x16xf32>
    %154 = arith.mulf %153, %137 : vector<16x16xf32>
    %155 = arith.addf %147, %154 : vector<16x16xf32>
    %156 = vector.extract_strided_slice %137 {offsets = [0, 1], sizes = [16, 15], strides = [1, 1]} : vector<16x16xf32> to vector<16x15xf32>
    %157 = tpu.concatenate %156, %37 in 1 : vector<16x15xf32>, vector<16x1xf32> -> vector<16x16xf32>
    %c11 = arith.constant 11 : index
    %158 = memref.load %arg6[%c11] : memref<36xf32, #tpu.memory_space<smem>>
    %159 = vector.broadcast %158 : f32 to vector<16x16xf32>
    %160 = arith.mulf %159, %157 : vector<16x16xf32>
    %161 = arith.addf %151, %160 : vector<16x16xf32>
    %c29 = arith.constant 29 : index
    %162 = memref.load %arg6[%c29] : memref<36xf32, #tpu.memory_space<smem>>
    %163 = vector.broadcast %162 : f32 to vector<16x16xf32>
    %164 = arith.mulf %163, %157 : vector<16x16xf32>
    %165 = arith.addf %155, %164 : vector<16x16xf32>
    %166 = vector.extract_strided_slice %43 {offsets = [0, 0], sizes = [16, 15], strides = [1, 1]} : vector<16x16xf32> to vector<16x15xf32>
    %167 = tpu.concatenate %37, %166 in 1 : vector<16x1xf32>, vector<16x15xf32> -> vector<16x16xf32>
    %c12 = arith.constant 12 : index
    %168 = memref.load %arg6[%c12] : memref<36xf32, #tpu.memory_space<smem>>
    %169 = vector.broadcast %168 : f32 to vector<16x16xf32>
    %170 = arith.mulf %169, %167 : vector<16x16xf32>
    %171 = arith.addf %161, %170 : vector<16x16xf32>
    %c30 = arith.constant 30 : index
    %172 = memref.load %arg6[%c30] : memref<36xf32, #tpu.memory_space<smem>>
    %173 = vector.broadcast %172 : f32 to vector<16x16xf32>
    %174 = arith.mulf %173, %167 : vector<16x16xf32>
    %175 = arith.addf %165, %174 : vector<16x16xf32>
    %c13 = arith.constant 13 : index
    %176 = memref.load %arg6[%c13] : memref<36xf32, #tpu.memory_space<smem>>
    %177 = vector.broadcast %176 : f32 to vector<16x16xf32>
    %178 = arith.mulf %177, %43 : vector<16x16xf32>
    %179 = arith.addf %171, %178 : vector<16x16xf32>
    %c31 = arith.constant 31 : index
    %180 = memref.load %arg6[%c31] : memref<36xf32, #tpu.memory_space<smem>>
    %181 = vector.broadcast %180 : f32 to vector<16x16xf32>
    %182 = arith.mulf %181, %43 : vector<16x16xf32>
    %183 = arith.addf %175, %182 : vector<16x16xf32>
    %184 = vector.extract_strided_slice %43 {offsets = [0, 1], sizes = [16, 15], strides = [1, 1]} : vector<16x16xf32> to vector<16x15xf32>
    %185 = tpu.concatenate %184, %37 in 1 : vector<16x15xf32>, vector<16x1xf32> -> vector<16x16xf32>
    %c14 = arith.constant 14 : index
    %186 = memref.load %arg6[%c14] : memref<36xf32, #tpu.memory_space<smem>>
    %187 = vector.broadcast %186 : f32 to vector<16x16xf32>
    %188 = arith.mulf %187, %185 : vector<16x16xf32>
    %189 = arith.addf %179, %188 : vector<16x16xf32>
    %c32_46 = arith.constant 32 : index
    %190 = memref.load %arg6[%c32_46] : memref<36xf32, #tpu.memory_space<smem>>
    %191 = vector.broadcast %190 : f32 to vector<16x16xf32>
    %192 = arith.mulf %191, %185 : vector<16x16xf32>
    %193 = arith.addf %183, %192 : vector<16x16xf32>
    %194 = vector.extract_strided_slice %43 {offsets = [1, 0], sizes = [15, 16], strides = [1, 1]} : vector<16x16xf32> to vector<15x16xf32>
    %195 = tpu.concatenate %194, %36 in 0 : vector<15x16xf32>, vector<1x16xf32> -> vector<16x16xf32>
    %196 = vector.extract_strided_slice %195 {offsets = [0, 0], sizes = [16, 15], strides = [1, 1]} : vector<16x16xf32> to vector<16x15xf32>
    %197 = tpu.concatenate %37, %196 in 1 : vector<16x1xf32>, vector<16x15xf32> -> vector<16x16xf32>
    %c15 = arith.constant 15 : index
    %198 = memref.load %arg6[%c15] : memref<36xf32, #tpu.memory_space<smem>>
    %199 = vector.broadcast %198 : f32 to vector<16x16xf32>
    %200 = arith.mulf %199, %197 : vector<16x16xf32>
    %201 = arith.addf %189, %200 : vector<16x16xf32>
    %c33 = arith.constant 33 : index
    %202 = memref.load %arg6[%c33] : memref<36xf32, #tpu.memory_space<smem>>
    %203 = vector.broadcast %202 : f32 to vector<16x16xf32>
    %204 = arith.mulf %203, %197 : vector<16x16xf32>
    %205 = arith.addf %193, %204 : vector<16x16xf32>
    %c16_47 = arith.constant 16 : index
    %206 = memref.load %arg6[%c16_47] : memref<36xf32, #tpu.memory_space<smem>>
    %207 = vector.broadcast %206 : f32 to vector<16x16xf32>
    %208 = arith.mulf %207, %195 : vector<16x16xf32>
    %209 = arith.addf %201, %208 : vector<16x16xf32>
    %c34 = arith.constant 34 : index
    %210 = memref.load %arg6[%c34] : memref<36xf32, #tpu.memory_space<smem>>
    %211 = vector.broadcast %210 : f32 to vector<16x16xf32>
    %212 = arith.mulf %211, %195 : vector<16x16xf32>
    %213 = arith.addf %205, %212 : vector<16x16xf32>
    %214 = vector.extract_strided_slice %195 {offsets = [0, 1], sizes = [16, 15], strides = [1, 1]} : vector<16x16xf32> to vector<16x15xf32>
    %215 = tpu.concatenate %214, %37 in 1 : vector<16x15xf32>, vector<16x1xf32> -> vector<16x16xf32>
    %c17 = arith.constant 17 : index
    %216 = memref.load %arg6[%c17] : memref<36xf32, #tpu.memory_space<smem>>
    %217 = vector.broadcast %216 : f32 to vector<16x16xf32>
    %218 = arith.mulf %217, %215 : vector<16x16xf32>
    %219 = arith.addf %209, %218 : vector<16x16xf32>
    %c35 = arith.constant 35 : index
    %220 = memref.load %arg6[%c35] : memref<36xf32, #tpu.memory_space<smem>>
    %221 = vector.broadcast %220 : f32 to vector<16x16xf32>
    %222 = arith.mulf %221, %215 : vector<16x16xf32>
    %223 = arith.addf %213, %222 : vector<16x16xf32>
    %224 = arith.addf %131, %219 : vector<16x16xf32>
    %c0_48 = arith.constant 0 : index
    %225 = memref.load %arg7[%c0_48] : memref<2xf32, #tpu.memory_space<smem>>
    %226 = vector.broadcast %225 : f32 to vector<16x16xf32>
    %227 = arith.addf %224, %226 : vector<16x16xf32>
    %c0_49 = arith.constant 0 : index
    %c0_50 = arith.constant 0 : index
    %228 = vector.load %arg9[%c0_49, %c0_50] : memref<64x16xf32, #tpu.memory_space<vmem>>, vector<16x16xf32>
    tpu.vector_store %arg9[%c0_49, %c0_50], %227 {strides = array<i32>} : memref<64x16xf32, #tpu.memory_space<vmem>>, vector<16x16xf32>,
    %229 = arith.addf %135, %223 : vector<16x16xf32>
    %c1_51 = arith.constant 1 : index
    %230 = memref.load %arg7[%c1_51] : memref<2xf32, #tpu.memory_space<smem>>
    %231 = vector.broadcast %230 : f32 to vector<16x16xf32>
    %232 = arith.addf %229, %231 : vector<16x16xf32>
    %c16_52 = arith.constant 16 : index
    %c0_53 = arith.constant 0 : index
    %233 = vector.load %arg9[%c16_52, %c0_53] : memref<64x16xf32, #tpu.memory_space<vmem>>, vector<16x16xf32>
    tpu.vector_store %arg9[%c16_52, %c0_53], %232 {strides = array<i32>} : memref<64x16xf32, #tpu.memory_space<vmem>>, vector<16x16xf32>,
    %234 = vector.extract_strided_slice %34 {offsets = [32, 0], sizes = [16, 16], strides = [1, 1]} : vector<64x16xf32> to vector<16x16xf32>
    %235 = vector.extract_strided_slice %35 {offsets = [48, 0], sizes = [16, 16], strides = [1, 1]} : vector<64x16xf32> to vector<16x16xf32>
    %236 = arith.subf %234, %235 : vector<16x16xf32>
    %237 = vector.extract_strided_slice %35 {offsets = [32, 0], sizes = [16, 16], strides = [1, 1]} : vector<64x16xf32> to vector<16x16xf32>
    %238 = vector.extract_strided_slice %34 {offsets = [48, 0], sizes = [16, 16], strides = [1, 1]} : vector<64x16xf32> to vector<16x16xf32>
    %239 = arith.addf %237, %238 : vector<16x16xf32>
    %cst_54 = arith.constant 0.000000e+00 : f32
    %240 = vector.broadcast %cst_54 : f32 to vector<16x16xf32>
    %cst_55 = arith.constant 0.000000e+00 : f32
    %241 = vector.broadcast %cst_55 : f32 to vector<16x16xf32>
    %cst_56 = arith.constant 0.000000e+00 : f32
    %242 = vector.broadcast %cst_56 : f32 to vector<16x16xf32>
    %cst_57 = arith.constant 0.000000e+00 : f32
    %243 = vector.broadcast %cst_57 : f32 to vector<16x16xf32>
    %244 = vector.extract_strided_slice %236 {offsets = [0, 0], sizes = [15, 16], strides = [1, 1]} : vector<16x16xf32> to vector<15x16xf32>
    %245 = tpu.concatenate %36, %244 in 0 : vector<1x16xf32>, vector<15x16xf32> -> vector<16x16xf32>
    %246 = vector.extract_strided_slice %245 {offsets = [0, 0], sizes = [16, 15], strides = [1, 1]} : vector<16x16xf32> to vector<16x15xf32>
    %247 = tpu.concatenate %37, %246 in 1 : vector<16x1xf32>, vector<16x15xf32> -> vector<16x16xf32>
    %c0_58 = arith.constant 0 : index
    %248 = memref.load %arg6[%c0_58] : memref<36xf32, #tpu.memory_space<smem>>
    %249 = vector.broadcast %248 : f32 to vector<16x16xf32>
    %250 = arith.mulf %249, %247 : vector<16x16xf32>
    %251 = arith.addf %240, %250 : vector<16x16xf32>
    %c18_59 = arith.constant 18 : index
    %252 = memref.load %arg6[%c18_59] : memref<36xf32, #tpu.memory_space<smem>>
    %253 = vector.broadcast %252 : f32 to vector<16x16xf32>
    %254 = arith.mulf %253, %247 : vector<16x16xf32>
    %255 = arith.addf %242, %254 : vector<16x16xf32>
    %c1_60 = arith.constant 1 : index
    %256 = memref.load %arg6[%c1_60] : memref<36xf32, #tpu.memory_space<smem>>
    %257 = vector.broadcast %256 : f32 to vector<16x16xf32>
    %258 = arith.mulf %257, %245 : vector<16x16xf32>
    %259 = arith.addf %251, %258 : vector<16x16xf32>
    %c19_61 = arith.constant 19 : index
    %260 = memref.load %arg6[%c19_61] : memref<36xf32, #tpu.memory_space<smem>>
    %261 = vector.broadcast %260 : f32 to vector<16x16xf32>
    %262 = arith.mulf %261, %245 : vector<16x16xf32>
    %263 = arith.addf %255, %262 : vector<16x16xf32>
    %264 = vector.extract_strided_slice %245 {offsets = [0, 1], sizes = [16, 15], strides = [1, 1]} : vector<16x16xf32> to vector<16x15xf32>
    %265 = tpu.concatenate %264, %37 in 1 : vector<16x15xf32>, vector<16x1xf32> -> vector<16x16xf32>
    %c2_62 = arith.constant 2 : index
    %266 = memref.load %arg6[%c2_62] : memref<36xf32, #tpu.memory_space<smem>>
    %267 = vector.broadcast %266 : f32 to vector<16x16xf32>
    %268 = arith.mulf %267, %265 : vector<16x16xf32>
    %269 = arith.addf %259, %268 : vector<16x16xf32>
    %c20_63 = arith.constant 20 : index
    %270 = memref.load %arg6[%c20_63] : memref<36xf32, #tpu.memory_space<smem>>
    %271 = vector.broadcast %270 : f32 to vector<16x16xf32>
    %272 = arith.mulf %271, %265 : vector<16x16xf32>
    %273 = arith.addf %263, %272 : vector<16x16xf32>
    %274 = vector.extract_strided_slice %236 {offsets = [0, 0], sizes = [16, 15], strides = [1, 1]} : vector<16x16xf32> to vector<16x15xf32>
    %275 = tpu.concatenate %37, %274 in 1 : vector<16x1xf32>, vector<16x15xf32> -> vector<16x16xf32>
    %c3_64 = arith.constant 3 : index
    %276 = memref.load %arg6[%c3_64] : memref<36xf32, #tpu.memory_space<smem>>
    %277 = vector.broadcast %276 : f32 to vector<16x16xf32>
    %278 = arith.mulf %277, %275 : vector<16x16xf32>
    %279 = arith.addf %269, %278 : vector<16x16xf32>
    %c21_65 = arith.constant 21 : index
    %280 = memref.load %arg6[%c21_65] : memref<36xf32, #tpu.memory_space<smem>>
    %281 = vector.broadcast %280 : f32 to vector<16x16xf32>
    %282 = arith.mulf %281, %275 : vector<16x16xf32>
    %283 = arith.addf %273, %282 : vector<16x16xf32>
    %c4_66 = arith.constant 4 : index
    %284 = memref.load %arg6[%c4_66] : memref<36xf32, #tpu.memory_space<smem>>
    %285 = vector.broadcast %284 : f32 to vector<16x16xf32>
    %286 = arith.mulf %285, %236 : vector<16x16xf32>
    %287 = arith.addf %279, %286 : vector<16x16xf32>
    %c22_67 = arith.constant 22 : index
    %288 = memref.load %arg6[%c22_67] : memref<36xf32, #tpu.memory_space<smem>>
    %289 = vector.broadcast %288 : f32 to vector<16x16xf32>
    %290 = arith.mulf %289, %236 : vector<16x16xf32>
    %291 = arith.addf %283, %290 : vector<16x16xf32>
    %292 = vector.extract_strided_slice %236 {offsets = [0, 1], sizes = [16, 15], strides = [1, 1]} : vector<16x16xf32> to vector<16x15xf32>
    %293 = tpu.concatenate %292, %37 in 1 : vector<16x15xf32>, vector<16x1xf32> -> vector<16x16xf32>
    %c5_68 = arith.constant 5 : index
    %294 = memref.load %arg6[%c5_68] : memref<36xf32, #tpu.memory_space<smem>>
    %295 = vector.broadcast %294 : f32 to vector<16x16xf32>
    %296 = arith.mulf %295, %293 : vector<16x16xf32>
    %297 = arith.addf %287, %296 : vector<16x16xf32>
    %c23_69 = arith.constant 23 : index
    %298 = memref.load %arg6[%c23_69] : memref<36xf32, #tpu.memory_space<smem>>
    %299 = vector.broadcast %298 : f32 to vector<16x16xf32>
    %300 = arith.mulf %299, %293 : vector<16x16xf32>
    %301 = arith.addf %291, %300 : vector<16x16xf32>
    %302 = vector.extract_strided_slice %236 {offsets = [1, 0], sizes = [15, 16], strides = [1, 1]} : vector<16x16xf32> to vector<15x16xf32>
    %303 = tpu.concatenate %302, %36 in 0 : vector<15x16xf32>, vector<1x16xf32> -> vector<16x16xf32>
    %304 = vector.extract_strided_slice %303 {offsets = [0, 0], sizes = [16, 15], strides = [1, 1]} : vector<16x16xf32> to vector<16x15xf32>
    %305 = tpu.concatenate %37, %304 in 1 : vector<16x1xf32>, vector<16x15xf32> -> vector<16x16xf32>
    %c6_70 = arith.constant 6 : index
    %306 = memref.load %arg6[%c6_70] : memref<36xf32, #tpu.memory_space<smem>>
    %307 = vector.broadcast %306 : f32 to vector<16x16xf32>
    %308 = arith.mulf %307, %305 : vector<16x16xf32>
    %309 = arith.addf %297, %308 : vector<16x16xf32>
    %c24_71 = arith.constant 24 : index
    %310 = memref.load %arg6[%c24_71] : memref<36xf32, #tpu.memory_space<smem>>
    %311 = vector.broadcast %310 : f32 to vector<16x16xf32>
    %312 = arith.mulf %311, %305 : vector<16x16xf32>
    %313 = arith.addf %301, %312 : vector<16x16xf32>
    %c7_72 = arith.constant 7 : index
    %314 = memref.load %arg6[%c7_72] : memref<36xf32, #tpu.memory_space<smem>>
    %315 = vector.broadcast %314 : f32 to vector<16x16xf32>
    %316 = arith.mulf %315, %303 : vector<16x16xf32>
    %317 = arith.addf %309, %316 : vector<16x16xf32>
    %c25_73 = arith.constant 25 : index
    %318 = memref.load %arg6[%c25_73] : memref<36xf32, #tpu.memory_space<smem>>
    %319 = vector.broadcast %318 : f32 to vector<16x16xf32>
    %320 = arith.mulf %319, %303 : vector<16x16xf32>
    %321 = arith.addf %313, %320 : vector<16x16xf32>
    %322 = vector.extract_strided_slice %303 {offsets = [0, 1], sizes = [16, 15], strides = [1, 1]} : vector<16x16xf32> to vector<16x15xf32>
    %323 = tpu.concatenate %322, %37 in 1 : vector<16x15xf32>, vector<16x1xf32> -> vector<16x16xf32>
    %c8_74 = arith.constant 8 : index
    %324 = memref.load %arg6[%c8_74] : memref<36xf32, #tpu.memory_space<smem>>
    %325 = vector.broadcast %324 : f32 to vector<16x16xf32>
    %326 = arith.mulf %325, %323 : vector<16x16xf32>
    %327 = arith.addf %317, %326 : vector<16x16xf32>
    %c26_75 = arith.constant 26 : index
    %328 = memref.load %arg6[%c26_75] : memref<36xf32, #tpu.memory_space<smem>>
    %329 = vector.broadcast %328 : f32 to vector<16x16xf32>
    %330 = arith.mulf %329, %323 : vector<16x16xf32>
    %331 = arith.addf %321, %330 : vector<16x16xf32>
    %332 = vector.extract_strided_slice %239 {offsets = [0, 0], sizes = [15, 16], strides = [1, 1]} : vector<16x16xf32> to vector<15x16xf32>
    %333 = tpu.concatenate %36, %332 in 0 : vector<1x16xf32>, vector<15x16xf32> -> vector<16x16xf32>
    %334 = vector.extract_strided_slice %333 {offsets = [0, 0], sizes = [16, 15], strides = [1, 1]} : vector<16x16xf32> to vector<16x15xf32>
    %335 = tpu.concatenate %37, %334 in 1 : vector<16x1xf32>, vector<16x15xf32> -> vector<16x16xf32>
    %c9_76 = arith.constant 9 : index
    %336 = memref.load %arg6[%c9_76] : memref<36xf32, #tpu.memory_space<smem>>
    %337 = vector.broadcast %336 : f32 to vector<16x16xf32>
    %338 = arith.mulf %337, %335 : vector<16x16xf32>
    %339 = arith.addf %241, %338 : vector<16x16xf32>
    %c27_77 = arith.constant 27 : index
    %340 = memref.load %arg6[%c27_77] : memref<36xf32, #tpu.memory_space<smem>>
    %341 = vector.broadcast %340 : f32 to vector<16x16xf32>
    %342 = arith.mulf %341, %335 : vector<16x16xf32>
    %343 = arith.addf %243, %342 : vector<16x16xf32>
    %c10_78 = arith.constant 10 : index
    %344 = memref.load %arg6[%c10_78] : memref<36xf32, #tpu.memory_space<smem>>
    %345 = vector.broadcast %344 : f32 to vector<16x16xf32>
    %346 = arith.mulf %345, %333 : vector<16x16xf32>
    %347 = arith.addf %339, %346 : vector<16x16xf32>
    %c28_79 = arith.constant 28 : index
    %348 = memref.load %arg6[%c28_79] : memref<36xf32, #tpu.memory_space<smem>>
    %349 = vector.broadcast %348 : f32 to vector<16x16xf32>
    %350 = arith.mulf %349, %333 : vector<16x16xf32>
    %351 = arith.addf %343, %350 : vector<16x16xf32>
    %352 = vector.extract_strided_slice %333 {offsets = [0, 1], sizes = [16, 15], strides = [1, 1]} : vector<16x16xf32> to vector<16x15xf32>
    %353 = tpu.concatenate %352, %37 in 1 : vector<16x15xf32>, vector<16x1xf32> -> vector<16x16xf32>
    %c11_80 = arith.constant 11 : index
    %354 = memref.load %arg6[%c11_80] : memref<36xf32, #tpu.memory_space<smem>>
    %355 = vector.broadcast %354 : f32 to vector<16x16xf32>
    %356 = arith.mulf %355, %353 : vector<16x16xf32>
    %357 = arith.addf %347, %356 : vector<16x16xf32>
    %c29_81 = arith.constant 29 : index
    %358 = memref.load %arg6[%c29_81] : memref<36xf32, #tpu.memory_space<smem>>
    %359 = vector.broadcast %358 : f32 to vector<16x16xf32>
    %360 = arith.mulf %359, %353 : vector<16x16xf32>
    %361 = arith.addf %351, %360 : vector<16x16xf32>
    %362 = vector.extract_strided_slice %239 {offsets = [0, 0], sizes = [16, 15], strides = [1, 1]} : vector<16x16xf32> to vector<16x15xf32>
    %363 = tpu.concatenate %37, %362 in 1 : vector<16x1xf32>, vector<16x15xf32> -> vector<16x16xf32>
    %c12_82 = arith.constant 12 : index
    %364 = memref.load %arg6[%c12_82] : memref<36xf32, #tpu.memory_space<smem>>
    %365 = vector.broadcast %364 : f32 to vector<16x16xf32>
    %366 = arith.mulf %365, %363 : vector<16x16xf32>
    %367 = arith.addf %357, %366 : vector<16x16xf32>
    %c30_83 = arith.constant 30 : index
    %368 = memref.load %arg6[%c30_83] : memref<36xf32, #tpu.memory_space<smem>>
    %369 = vector.broadcast %368 : f32 to vector<16x16xf32>
    %370 = arith.mulf %369, %363 : vector<16x16xf32>
    %371 = arith.addf %361, %370 : vector<16x16xf32>
    %c13_84 = arith.constant 13 : index
    %372 = memref.load %arg6[%c13_84] : memref<36xf32, #tpu.memory_space<smem>>
    %373 = vector.broadcast %372 : f32 to vector<16x16xf32>
    %374 = arith.mulf %373, %239 : vector<16x16xf32>
    %375 = arith.addf %367, %374 : vector<16x16xf32>
    %c31_85 = arith.constant 31 : index
    %376 = memref.load %arg6[%c31_85] : memref<36xf32, #tpu.memory_space<smem>>
    %377 = vector.broadcast %376 : f32 to vector<16x16xf32>
    %378 = arith.mulf %377, %239 : vector<16x16xf32>
    %379 = arith.addf %371, %378 : vector<16x16xf32>
    %380 = vector.extract_strided_slice %239 {offsets = [0, 1], sizes = [16, 15], strides = [1, 1]} : vector<16x16xf32> to vector<16x15xf32>
    %381 = tpu.concatenate %380, %37 in 1 : vector<16x15xf32>, vector<16x1xf32> -> vector<16x16xf32>
    %c14_86 = arith.constant 14 : index
    %382 = memref.load %arg6[%c14_86] : memref<36xf32, #tpu.memory_space<smem>>
    %383 = vector.broadcast %382 : f32 to vector<16x16xf32>
    %384 = arith.mulf %383, %381 : vector<16x16xf32>
    %385 = arith.addf %375, %384 : vector<16x16xf32>
    %c32_87 = arith.constant 32 : index
    %386 = memref.load %arg6[%c32_87] : memref<36xf32, #tpu.memory_space<smem>>
    %387 = vector.broadcast %386 : f32 to vector<16x16xf32>
    %388 = arith.mulf %387, %381 : vector<16x16xf32>
    %389 = arith.addf %379, %388 : vector<16x16xf32>
    %390 = vector.extract_strided_slice %239 {offsets = [1, 0], sizes = [15, 16], strides = [1, 1]} : vector<16x16xf32> to vector<15x16xf32>
    %391 = tpu.concatenate %390, %36 in 0 : vector<15x16xf32>, vector<1x16xf32> -> vector<16x16xf32>
    %392 = vector.extract_strided_slice %391 {offsets = [0, 0], sizes = [16, 15], strides = [1, 1]} : vector<16x16xf32> to vector<16x15xf32>
    %393 = tpu.concatenate %37, %392 in 1 : vector<16x1xf32>, vector<16x15xf32> -> vector<16x16xf32>
    %c15_88 = arith.constant 15 : index
    %394 = memref.load %arg6[%c15_88] : memref<36xf32, #tpu.memory_space<smem>>
    %395 = vector.broadcast %394 : f32 to vector<16x16xf32>
    %396 = arith.mulf %395, %393 : vector<16x16xf32>
    %397 = arith.addf %385, %396 : vector<16x16xf32>
    %c33_89 = arith.constant 33 : index
    %398 = memref.load %arg6[%c33_89] : memref<36xf32, #tpu.memory_space<smem>>
    %399 = vector.broadcast %398 : f32 to vector<16x16xf32>
    %400 = arith.mulf %399, %393 : vector<16x16xf32>
    %401 = arith.addf %389, %400 : vector<16x16xf32>
    %c16_90 = arith.constant 16 : index
    %402 = memref.load %arg6[%c16_90] : memref<36xf32, #tpu.memory_space<smem>>
    %403 = vector.broadcast %402 : f32 to vector<16x16xf32>
    %404 = arith.mulf %403, %391 : vector<16x16xf32>
    %405 = arith.addf %397, %404 : vector<16x16xf32>
    %c34_91 = arith.constant 34 : index
    %406 = memref.load %arg6[%c34_91] : memref<36xf32, #tpu.memory_space<smem>>
    %407 = vector.broadcast %406 : f32 to vector<16x16xf32>
    %408 = arith.mulf %407, %391 : vector<16x16xf32>
    %409 = arith.addf %401, %408 : vector<16x16xf32>
    %410 = vector.extract_strided_slice %391 {offsets = [0, 1], sizes = [16, 15], strides = [1, 1]} : vector<16x16xf32> to vector<16x15xf32>
    %411 = tpu.concatenate %410, %37 in 1 : vector<16x15xf32>, vector<16x1xf32> -> vector<16x16xf32>
    %c17_92 = arith.constant 17 : index
    %412 = memref.load %arg6[%c17_92] : memref<36xf32, #tpu.memory_space<smem>>
    %413 = vector.broadcast %412 : f32 to vector<16x16xf32>
    %414 = arith.mulf %413, %411 : vector<16x16xf32>
    %415 = arith.addf %405, %414 : vector<16x16xf32>
    %c35_93 = arith.constant 35 : index
    %416 = memref.load %arg6[%c35_93] : memref<36xf32, #tpu.memory_space<smem>>
    %417 = vector.broadcast %416 : f32 to vector<16x16xf32>
    %418 = arith.mulf %417, %411 : vector<16x16xf32>
    %419 = arith.addf %409, %418 : vector<16x16xf32>
    %420 = arith.addf %327, %415 : vector<16x16xf32>
    %c0_94 = arith.constant 0 : index
    %421 = memref.load %arg7[%c0_94] : memref<2xf32, #tpu.memory_space<smem>>
    %422 = vector.broadcast %421 : f32 to vector<16x16xf32>
    %423 = arith.addf %420, %422 : vector<16x16xf32>
    %c32_95 = arith.constant 32 : index
    %c0_96 = arith.constant 0 : index
    %424 = vector.load %arg9[%c32_95, %c0_96] : memref<64x16xf32, #tpu.memory_space<vmem>>, vector<16x16xf32>
    tpu.vector_store %arg9[%c32_95, %c0_96], %423 {strides = array<i32>} : memref<64x16xf32, #tpu.memory_space<vmem>>, vector<16x16xf32>,
    %425 = arith.addf %331, %419 : vector<16x16xf32>
    %c1_97 = arith.constant 1 : index
    %426 = memref.load %arg7[%c1_97] : memref<2xf32, #tpu.memory_space<smem>>
    %427 = vector.broadcast %426 : f32 to vector<16x16xf32>
    %428 = arith.addf %425, %427 : vector<16x16xf32>
    %c48_98 = arith.constant 48 : index
    %c0_99 = arith.constant 0 : index
    %429 = vector.load %arg9[%c48_98, %c0_99] : memref<64x16xf32, #tpu.memory_space<vmem>>, vector<16x16xf32>
    tpu.vector_store %arg9[%c48_98, %c0_99], %428 {strides = array<i32>} : memref<64x16xf32, #tpu.memory_space<vmem>>, vector<16x16xf32>,
    %c0_100 = arith.constant 0 : index
    %c0_101 = arith.constant 0 : index
    %430 = vector.load %arg9[%c0_100, %c0_101] : memref<64x16xf32, #tpu.memory_space<vmem>>, vector<16x16xf32>
    %431 = arith.truncf %430 : vector<16x16xf32> to vector<16x16xbf16>
    %c16_102 = arith.constant 16 : index
    %c0_103 = arith.constant 0 : index
    %432 = vector.load %arg9[%c16_102, %c0_103] : memref<64x16xf32, #tpu.memory_space<vmem>>, vector<16x16xf32>
    %433 = arith.truncf %432 : vector<16x16xf32> to vector<16x16xbf16>
    %cst_104 = arith.constant dense<0.000000e+00> : vector<16x16xf32>
    %434 = tpu.matmul %0, %431, %cst_104 {dimension_numbers = #tpu.dot_dimension_numbers<[1], [0], [0], [1], [0, 0, 1, 1], [], []>} : vector<16x16xbf16>, vector<16x16xbf16>, vector<16x16xf32> -> vector<16x16xf32>
    %cst_105 = arith.constant dense<0.000000e+00> : vector<16x16xf32>
    %435 = tpu.matmul %1, %433, %cst_105 {dimension_numbers = #tpu.dot_dimension_numbers<[1], [0], [0], [1], [0, 0, 1, 1], [], []>} : vector<16x16xbf16>, vector<16x16xbf16>, vector<16x16xf32> -> vector<16x16xf32>
    %436 = arith.addf %434, %435 : vector<16x16xf32>
    %c0_106 = arith.constant 0 : index
    %c0_107 = arith.constant 0 : index
    %437 = vector.load %arg9[%c0_106, %c0_107] : memref<64x16xf32, #tpu.memory_space<vmem>>, vector<16x16xf32>
    tpu.vector_store %arg9[%c0_106, %c0_107], %436 {strides = array<i32>} : memref<64x16xf32, #tpu.memory_space<vmem>>, vector<16x16xf32>,
    %cst_108 = arith.constant dense<0.000000e+00> : vector<16x16xf32>
    %438 = tpu.matmul %0, %433, %cst_108 {dimension_numbers = #tpu.dot_dimension_numbers<[1], [0], [0], [1], [0, 0, 1, 1], [], []>} : vector<16x16xbf16>, vector<16x16xbf16>, vector<16x16xf32> -> vector<16x16xf32>
    %cst_109 = arith.constant dense<0.000000e+00> : vector<16x16xf32>
    %439 = tpu.matmul %1, %431, %cst_109 {dimension_numbers = #tpu.dot_dimension_numbers<[1], [0], [0], [1], [0, 0, 1, 1], [], []>} : vector<16x16xbf16>, vector<16x16xbf16>, vector<16x16xf32> -> vector<16x16xf32>
    %440 = arith.subf %438, %439 : vector<16x16xf32>
    %c16_110 = arith.constant 16 : index
    %c0_111 = arith.constant 0 : index
    %441 = vector.load %arg9[%c16_110, %c0_111] : memref<64x16xf32, #tpu.memory_space<vmem>>, vector<16x16xf32>
    tpu.vector_store %arg9[%c16_110, %c0_111], %440 {strides = array<i32>} : memref<64x16xf32, #tpu.memory_space<vmem>>, vector<16x16xf32>,
    %c32_112 = arith.constant 32 : index
    %c0_113 = arith.constant 0 : index
    %442 = vector.load %arg9[%c32_112, %c0_113] : memref<64x16xf32, #tpu.memory_space<vmem>>, vector<16x16xf32>
    %443 = arith.truncf %442 : vector<16x16xf32> to vector<16x16xbf16>
    %c48_114 = arith.constant 48 : index
    %c0_115 = arith.constant 0 : index
    %444 = vector.load %arg9[%c48_114, %c0_115] : memref<64x16xf32, #tpu.memory_space<vmem>>, vector<16x16xf32>
    %445 = arith.truncf %444 : vector<16x16xf32> to vector<16x16xbf16>
    %cst_116 = arith.constant dense<0.000000e+00> : vector<16x16xf32>
    %446 = tpu.matmul %0, %443, %cst_116 {dimension_numbers = #tpu.dot_dimension_numbers<[1], [0], [0], [1], [0, 0, 1, 1], [], []>} : vector<16x16xbf16>, vector<16x16xbf16>, vector<16x16xf32> -> vector<16x16xf32>
    %cst_117 = arith.constant dense<0.000000e+00> : vector<16x16xf32>
    %447 = tpu.matmul %1, %445, %cst_117 {dimension_numbers = #tpu.dot_dimension_numbers<[1], [0], [0], [1], [0, 0, 1, 1], [], []>} : vector<16x16xbf16>, vector<16x16xbf16>, vector<16x16xf32> -> vector<16x16xf32>
    %448 = arith.addf %446, %447 : vector<16x16xf32>
    %c32_118 = arith.constant 32 : index
    %c0_119 = arith.constant 0 : index
    %449 = vector.load %arg9[%c32_118, %c0_119] : memref<64x16xf32, #tpu.memory_space<vmem>>, vector<16x16xf32>
    tpu.vector_store %arg9[%c32_118, %c0_119], %448 {strides = array<i32>} : memref<64x16xf32, #tpu.memory_space<vmem>>, vector<16x16xf32>,
    %cst_120 = arith.constant dense<0.000000e+00> : vector<16x16xf32>
    %450 = tpu.matmul %0, %445, %cst_120 {dimension_numbers = #tpu.dot_dimension_numbers<[1], [0], [0], [1], [0, 0, 1, 1], [], []>} : vector<16x16xbf16>, vector<16x16xbf16>, vector<16x16xf32> -> vector<16x16xf32>
    %cst_121 = arith.constant dense<0.000000e+00> : vector<16x16xf32>
    %451 = tpu.matmul %1, %443, %cst_121 {dimension_numbers = #tpu.dot_dimension_numbers<[1], [0], [0], [1], [0, 0, 1, 1], [], []>} : vector<16x16xbf16>, vector<16x16xbf16>, vector<16x16xf32> -> vector<16x16xf32>
    %452 = arith.subf %450, %451 : vector<16x16xf32>
    %c48_122 = arith.constant 48 : index
    %c0_123 = arith.constant 0 : index
    %453 = vector.load %arg9[%c48_122, %c0_123] : memref<64x16xf32, #tpu.memory_space<vmem>>, vector<16x16xf32>
    tpu.vector_store %arg9[%c48_122, %c0_123], %452 {strides = array<i32>} : memref<64x16xf32, #tpu.memory_space<vmem>>, vector<16x16xf32>,
    %c0_124 = arith.constant 0 : index
    %c0_125 = arith.constant 0 : index
    %454 = vector.load %arg9[%c0_124, %c0_125] : memref<64x16xf32, #tpu.memory_space<vmem>>, vector<64x16xf32>
    %455 = arith.truncf %454 : vector<64x16xf32> to vector<64x16xbf16>
    %cst_126 = arith.constant dense<0.000000e+00> : vector<64x16xf32>
    %456 = tpu.matmul %455, %2, %cst_126 {dimension_numbers = #tpu.dot_dimension_numbers<[1], [0], [0], [1], [0, 0, 1, 1], [], []>} : vector<64x16xbf16>, vector<16x16xbf16>, vector<64x16xf32> -> vector<64x16xf32>
    %cst_127 = arith.constant dense<0.000000e+00> : vector<64x16xf32>
    %457 = tpu.matmul %455, %3, %cst_127 {dimension_numbers = #tpu.dot_dimension_numbers<[1], [0], [0], [1], [0, 0, 1, 1], [], []>} : vector<64x16xbf16>, vector<16x16xbf16>, vector<64x16xf32> -> vector<64x16xf32>
    %458 = vector.extract_strided_slice %456 {offsets = [0, 0], sizes = [16, 16], strides = [1, 1]} : vector<64x16xf32> to vector<16x16xf32>
    %459 = vector.extract_strided_slice %457 {offsets = [16, 0], sizes = [16, 16], strides = [1, 1]} : vector<64x16xf32> to vector<16x16xf32>
    %460 = arith.addf %458, %459 : vector<16x16xf32>
    %c0_128 = arith.constant 0 : index
    %c0_129 = arith.constant 0 : index
    %c0_130 = arith.constant 0 : index
    %c0_131 = arith.constant 0 : index
    %461 = vector.load %arg8[%c0_128, %c0_129, %c0_130, %c0_131] : memref<2x2x16x16xf32, #tpu.memory_space<vmem>>, vector<1x1x16x16xf32>
    %462 = vector.shape_cast %461 : vector<1x1x16x16xf32> to vector<16x16xf32>
    %463 = vector.shape_cast %460 : vector<16x16xf32> to vector<1x1x16x16xf32>
    tpu.vector_store %arg8[%c0_128, %c0_129, %c0_130, %c0_131], %463 {strides = array<i32>} : memref<2x2x16x16xf32, #tpu.memory_space<vmem>>, vector<1x1x16x16xf32>,
    %464 = vector.extract_strided_slice %456 {offsets = [16, 0], sizes = [16, 16], strides = [1, 1]} : vector<64x16xf32> to vector<16x16xf32>
    %465 = vector.extract_strided_slice %457 {offsets = [0, 0], sizes = [16, 16], strides = [1, 1]} : vector<64x16xf32> to vector<16x16xf32>
    %466 = arith.subf %464, %465 : vector<16x16xf32>
    %c0_132 = arith.constant 0 : index
    %c1_133 = arith.constant 1 : index
    %c0_134 = arith.constant 0 : index
    %c0_135 = arith.constant 0 : index
    %467 = vector.load %arg8[%c0_132, %c1_133, %c0_134, %c0_135] : memref<2x2x16x16xf32, #tpu.memory_space<vmem>>, vector<1x1x16x16xf32>
    %468 = vector.shape_cast %467 : vector<1x1x16x16xf32> to vector<16x16xf32>
    %469 = vector.shape_cast %466 : vector<16x16xf32> to vector<1x1x16x16xf32>
    tpu.vector_store %arg8[%c0_132, %c1_133, %c0_134, %c0_135], %469 {strides = array<i32>} : memref<2x2x16x16xf32, #tpu.memory_space<vmem>>, vector<1x1x16x16xf32>,
    %470 = vector.extract_strided_slice %456 {offsets = [32, 0], sizes = [16, 16], strides = [1, 1]} : vector<64x16xf32> to vector<16x16xf32>
    %471 = vector.extract_strided_slice %457 {offsets = [48, 0], sizes = [16, 16], strides = [1, 1]} : vector<64x16xf32> to vector<16x16xf32>
    %472 = arith.addf %470, %471 : vector<16x16xf32>
    %c1_136 = arith.constant 1 : index
    %c0_137 = arith.constant 0 : index
    %c0_138 = arith.constant 0 : index
    %c0_139 = arith.constant 0 : index
    %473 = vector.load %arg8[%c1_136, %c0_137, %c0_138, %c0_139] : memref<2x2x16x16xf32, #tpu.memory_space<vmem>>, vector<1x1x16x16xf32>
    %474 = vector.shape_cast %473 : vector<1x1x16x16xf32> to vector<16x16xf32>
    %475 = vector.shape_cast %472 : vector<16x16xf32> to vector<1x1x16x16xf32>
    tpu.vector_store %arg8[%c1_136, %c0_137, %c0_138, %c0_139], %475 {strides = array<i32>} : memref<2x2x16x16xf32, #tpu.memory_space<vmem>>, vector<1x1x16x16xf32>,
    %476 = vector.extract_strided_slice %456 {offsets = [48, 0], sizes = [16, 16], strides = [1, 1]} : vector<64x16xf32> to vector<16x16xf32>
    %477 = vector.extract_strided_slice %457 {offsets = [32, 0], sizes = [16, 16], strides = [1, 1]} : vector<64x16xf32> to vector<16x16xf32>
    %478 = arith.subf %476, %477 : vector<16x16xf32>
    %c1_140 = arith.constant 1 : index
    %c1_141 = arith.constant 1 : index
    %c0_142 = arith.constant 0 : index
    %c0_143 = arith.constant 0 : index
    %479 = vector.load %arg8[%c1_140, %c1_141, %c0_142, %c0_143] : memref<2x2x16x16xf32, #tpu.memory_space<vmem>>, vector<1x1x16x16xf32>
    %480 = vector.shape_cast %479 : vector<1x1x16x16xf32> to vector<16x16xf32>
    %481 = vector.shape_cast %478 : vector<16x16xf32> to vector<1x1x16x16xf32>
    tpu.vector_store %arg8[%c1_140, %c1_141, %c0_142, %c0_143], %481 {strides = array<i32>} : memref<2x2x16x16xf32, #tpu.memory_space<vmem>>, vector<1x1x16x16xf32>,
    return
  }
  func.func @transform_0(%arg0: i32) -> (i32, i32, i32, i32) {
    %c0_i32 = arith.constant 0 : i32
    %c0_i32_0 = arith.constant 0 : i32
    %c0_i32_1 = arith.constant 0 : i32
    %c0_i32_2 = arith.constant 0 : i32
    return %arg0, %c0_i32, %c0_i32_0, %c0_i32_1 : i32, i32, i32, i32
  }
  func.func @transform_1(%arg0: i32) -> (i32, i32) {
    %c0_i32 = arith.constant 0 : i32
    %c0_i32_0 = arith.constant 0 : i32
    %c0_i32_1 = arith.constant 0 : i32
    return %c0_i32, %c0_i32_0 : i32, i32
  }
  func.func @transform_2(%arg0: i32) -> (i32, i32) {
    %c0_i32 = arith.constant 0 : i32
    %c0_i32_0 = arith.constant 0 : i32
    %c0_i32_1 = arith.constant 0 : i32
    return %c0_i32, %c0_i32_0 : i32, i32
  }
  func.func @transform_3(%arg0: i32) -> (i32, i32) {
    %c0_i32 = arith.constant 0 : i32
    %c0_i32_0 = arith.constant 0 : i32
    %c0_i32_1 = arith.constant 0 : i32
    return %c0_i32, %c0_i32_0 : i32, i32
  }
  func.func @transform_4(%arg0: i32) -> (i32, i32) {
    %c0_i32 = arith.constant 0 : i32
    %c0_i32_0 = arith.constant 0 : i32
    %c0_i32_1 = arith.constant 0 : i32
    return %c0_i32, %c0_i32_0 : i32, i32
  }
  func.func @transform_5(%arg0: i32) -> i32 {
    %c0_i32 = arith.constant 0 : i32
    %c0_i32_0 = arith.constant 0 : i32
    return %c0_i32 : i32
  }
  func.func @transform_6(%arg0: i32) -> i32 {
    %c0_i32 = arith.constant 0 : i32
    %c0_i32_0 = arith.constant 0 : i32
    return %c0_i32 : i32
  }
  func.func @transform_7(%arg0: i32) -> (i32, i32, i32, i32) {
    %c0_i32 = arith.constant 0 : i32
    %c0_i32_0 = arith.constant 0 : i32
    %c0_i32_1 = arith.constant 0 : i32
    %c0_i32_2 = arith.constant 0 : i32
    return %arg0, %c0_i32, %c0_i32_0, %c0_i32_1 : i32, i32, i32, i32
  }
}

</mosaic_0001>

<llo_original>
// kernel: fft_nn_wrapper.1
$region0: #{fft_nn_wrapper.1}
  #allocation0 [shape = 'u32[]', space=smem, size = 0x4, offset = 0x4, fixed_abs, tag = 'smem constant byte address 0x4 - core index']
  #allocation1 [shape = 'u32[144,128]{1,0:T(1,128)}', space=vmem, size = 0x12000, scoped, tag = 'internal scratch']
  #allocation2 [shape = 'f32[64,16]{1,0:T(8,128)}', space=vmem, size = 0x8000, scoped, tag = 'scratch operand']
  %s0 = inlined_call_operand.hbm [shape: f32[2,2,16,16], index: 0, kind: input, shape index: {}]
  %s1 = inlined_call_operand.vmem [shape: bf16[16,16], index: 1, kind: input, shape index: {}, may-alias: {1,3}]
  %s2 = inlined_call_operand.vmem [shape: bf16[16,16], index: 2, kind: input, shape index: {}, may-alias: {2,4}]
  %s3 = inlined_call_operand.vmem [shape: bf16[16,16], index: 3, kind: input, shape index: {}, may-alias: {1,3}]
  %s4 = inlined_call_operand.vmem [shape: bf16[16,16], index: 4, kind: input, shape index: {}, may-alias: {2,4}]
  %s5 = inlined_call_operand.vmem [shape: f32[36], index: 5, kind: input, shape index: {}]
  %s6 = inlined_call_operand.vmem [shape: f32[2], index: 6, kind: input, shape index: {}]
  %s7 = inlined_call_operand.hbm [shape: f32[2,2,16,16], index: 7, kind: output, shape index: {}]
  %s8 = sld [smem:[#allocation0]]
  $region50: #{fft_nn_wrapper.1} parent=0
    _
  %s10 = ssub.s32 1, %s8
  %s11 = scalar_select 0, %s10, %s8
  $region1: #{fft_nn_wrapper.1} parent=0
    #allocation3 [shape = 'u8[32768]{0}', space=vmem, size = 0x8000, scoped, tag = 'input window, operand 0, single buffered']
    #allocation4 [shape = 's32[1]{0}', space=sflag, size = 0x4, scoped, tag = 'scoped memory for fft_nn_wrapper.1']
    #allocation5 [shape = 's32[1]{0}', space=sflag, size = 0x4, scoped, tag = 'scoped memory for fft_nn_wrapper.1']
    #allocation6 [shape = 's32[1]{0}', space=sflag, size = 0x4, scoped, tag = 'scoped memory for fft_nn_wrapper.1']
    #allocation7 [shape = 'u8[512]{0}', space=smem, size = 0x200, scoped, tag = 'input window, operand 5, single buffered']
    #allocation8 [shape = 'u8[512]{0}', space=smem, size = 0x200, scoped, tag = 'input window, operand 6, single buffered']
    #allocation9 [shape = 's32[1]{0}', space=sflag, size = 0x4, scoped, tag = 'scoped memory for fft_nn_wrapper.1']
    #allocation10 [shape = 'u8[32768]{0}', space=vmem, size = 0x8000, scoped, tag = 'output window, operand 0, single buffered']
    %12 = vsyncpa [#allocation4], 0
    %13 = vsyncpa [#allocation6], 0
    %14 = vsyncpa [#allocation9], 0
    %15 = vsyncpa [#allocation5], 0
    // Predicated region
    $region2: #{fft_nn_wrapper.1} parent=1 // pred_check
      _
    $region3: #{fft_nn_wrapper.1} parent=1 // pred_check_branch
      %17 = sbr.rel (0) target = $region5
    $region4: #{fft_nn_wrapper.1} parent=1 // pred_region
      %s19 = ssub.s32 1024, 1024
      %20 = vsyncadd [#allocation4], %s19
      %s21 = sshll.u32 [#allocation3], 4
      %s22 = int_to_ptr.vmem [resolvable:$true] %s21
      %27 = dma.hbm_to_vmem [thread:$0]  %s0, 1024, %s22, [#allocation4], 128, 128, 8
    $region5: #{fft_nn_wrapper.1} parent=1 // pred_fallthru
      _
    // Predicated region
    $region6: #{fft_nn_wrapper.1} parent=1 // pred_check
      _
    $region7: #{fft_nn_wrapper.1} parent=1 // pred_check_branch
      %29 = sbr.rel (0) target = $region9
    $region8: #{fft_nn_wrapper.1} parent=1 // pred_region
      _
    $region9: #{fft_nn_wrapper.1} parent=1 // pred_fallthru
      _
    // Predicated region
    $region10: #{fft_nn_wrapper.1} parent=1 // pred_check
      _
    $region11: #{fft_nn_wrapper.1} parent=1 // pred_check_branch
      %31 = sbr.rel (0) target = $region13
    $region12: #{fft_nn_wrapper.1} parent=1 // pred_region
      _
    $region13: #{fft_nn_wrapper.1} parent=1 // pred_fallthru
      _
    // Predicated region
    $region14: #{fft_nn_wrapper.1} parent=1 // pred_check
      _
    $region15: #{fft_nn_wrapper.1} parent=1 // pred_check_branch
      %33 = sbr.rel (0) target = $region17
    $region16: #{fft_nn_wrapper.1} parent=1 // pred_region
      _
    $region17: #{fft_nn_wrapper.1} parent=1 // pred_fallthru
      _
    // Predicated region
    $region18: #{fft_nn_wrapper.1} parent=1 // pred_check
      _
    $region19: #{fft_nn_wrapper.1} parent=1 // pred_check_branch
      %35 = sbr.rel (0) target = $region21
    $region20: #{fft_nn_wrapper.1} parent=1 // pred_region
      _
    $region21: #{fft_nn_wrapper.1} parent=1 // pred_fallthru
      _
    // Predicated region
    $region22: #{fft_nn_wrapper.1} parent=1 // pred_check
      _
    $region23: #{fft_nn_wrapper.1} parent=1 // pred_check_branch
      %37 = sbr.rel (0) target = $region25
    $region24: #{fft_nn_wrapper.1} parent=1 // pred_region
      %s39 = ssub.s32 16, 16
      %40 = vsyncadd [#allocation6], %s39
      %s42 = sshll.u32 %s5, 4
      %s43 = int_to_ptr.vmem [resolvable:$true] %s42
      %45 = dma.vmem_to_smem %s43, 16, [#allocation7], [#allocation6]
    $region25: #{fft_nn_wrapper.1} parent=1 // pred_fallthru
      _
    // Predicated region
    $region26: #{fft_nn_wrapper.1} parent=1 // pred_check
      _
    $region27: #{fft_nn_wrapper.1} parent=1 // pred_check_branch
      %47 = sbr.rel (0) target = $region29
    $region28: #{fft_nn_wrapper.1} parent=1 // pred_region
      %s49 = ssub.s32 16, 16
      %50 = vsyncadd [#allocation9], %s49
      %s52 = sshll.u32 %s6, 4
      %s53 = int_to_ptr.vmem [resolvable:$true] %s52
      %55 = dma.vmem_to_smem %s53, 16, [#allocation8], [#allocation9]
    $region29: #{fft_nn_wrapper.1} parent=1 // pred_fallthru
      _
    // Predicated region
    $region30: #{fft_nn_wrapper.1} parent=1 // pred_check
      _
    $region31: #{fft_nn_wrapper.1} parent=1 // pred_check_branch
      %57 = sbr.rel (0) target = $region33
    $region32: #{fft_nn_wrapper.1} parent=1 // pred_region
      %58 = dma.done [#allocation4], 1024
    $region33: #{fft_nn_wrapper.1} parent=1 // pred_fallthru
      _
    // Predicated region
    $region34: #{fft_nn_wrapper.1} parent=1 // pred_check
      _
    $region35: #{fft_nn_wrapper.1} parent=1 // pred_check_branch
      %60 = sbr.rel (0) target = $region37
    $region36: #{fft_nn_wrapper.1} parent=1 // pred_region
      %61 = dma.done [#allocation6], 16
    $region37: #{fft_nn_wrapper.1} parent=1 // pred_fallthru
      _
    // Predicated region
    $region38: #{fft_nn_wrapper.1} parent=1 // pred_check
      _
    $region39: #{fft_nn_wrapper.1} parent=1 // pred_check_branch
      %63 = sbr.rel (0) target = $region41
    $region40: #{fft_nn_wrapper.1} parent=1 // pred_region
      %64 = dma.done [#allocation9], 16
    $region41: #{fft_nn_wrapper.1} parent=1 // pred_fallthru
      _
    %65 = sfence
    %v67 = vld [vmem:[%s1] sm:$0xf]
    %v68 = vld [vmem:[%s1 + $0x4] sm:$0xf]
    %v69 = vld [vmem:[%s2] sm:$0xf]
    %v70 = vld [vmem:[%s2 + $0x4] sm:$0xf]
    %v71 = vld [vmem:[%s3] sm:$0xf]
    %v72 = vld [vmem:[%s3 + $0x4] sm:$0xf]
    %v73 = vld [vmem:[%s4] sm:$0xf]
    %v74 = vld [vmem:[%s4 + $0x4] sm:$0xf]
    %v75 = vld [vmem:[#allocation3] sm:$0xff]
    %v76 = vld [vmem:[#allocation3 + $0x8] sm:$0xff]
    %v77 = vpack.c.bf16 %v76, %v75
    %s78 = scalar_lea.vmem [#allocation3], 16
    %v79 = vld [vmem:[%s78] sm:$0xff]
    %v80 = vld [vmem:[%s78 + $0x8] sm:$0xff]
    %v81 = vpack.c.bf16 %v80, %v79
    %v84 = vunpack.c.l.b16 %v67
    %v85 = vunpack.c.l.b16 %v68
    %v86 = vpack.c.b16 %v85, %v84
    %vm87 = vcmask 130048
    %v89 = vsel %vm87, %v86, 0
    %91 = vmatprep.subr.bf16.mxu0 0
    %92 = vmatpush1.bf16.msra.mxu0 0
    %93 = vmatprep.subr.bf16.mxu0 0
    %94 = vmatpush1.bf16.msra.mxu0 0
    %95 = vmatprep.subr.bf16.mxu0 0
    %96 = vmatpush1.bf16.msra.mxu0 0
    %97 = vmatprep.subr.bf16.mxu0 0
    %98 = vmatpush1.bf16.msra.mxu0 0
    %99 = vmatprep.subr.bf16.mxu0 0
    %100 = vmatpush1.bf16.msra.mxu0 0
    %101 = vmatprep.subr.bf16.mxu0 0
    %102 = vmatpush1.bf16.msra.mxu0 0
    %103 = vmatprep.subr.bf16.mxu0 0
    %104 = vmatpush1.bf16.msra.mxu0 0
    %105 = vmatprep.subr.bf16.mxu0 0
    %106 = vmatpush1.bf16.msra.mxu0 %v77
    %107 = vmatprep.subr.bf16.mxu0 0
    %108 = vmatpush2.bf16.msra.mxu0 0
    %109 = vmatprep.subr.bf16.mxu0 0
    %110 = vmatpush2.bf16.msra.mxu0 0
    %111 = vmatprep.subr.bf16.mxu0 0
    %112 = vmatpush2.bf16.msra.mxu0 0
    %113 = vmatprep.subr.bf16.mxu0 0
    %114 = vmatpush2.bf16.msra.mxu0 0
    %115 = vmatprep.subr.bf16.mxu0 0
    %116 = vmatpush2.bf16.msra.mxu0 0
    %117 = vmatprep.subr.bf16.mxu0 0
    %118 = vmatpush2.bf16.msra.mxu0 0
    %119 = vmatprep.subr.bf16.mxu0 0
    %120 = vmatpush2.bf16.msra.mxu0 0
    %121 = vmatprep.subr.bf16.mxu0 0
    %122 = vmatpush2.bf16.msra.mxu0 0
    %123 = vmatprep.mubr.bf16.mxu0 0
    %124 = vmatmul.mubr.bf16.gmra.mxu0 %v89
    %v125 = vpop.f32.mrf.mxu0
    %v126 = vadd.f32 0.0, %v125
    %v127 = vpop.f32.mrf.mxu0
    %v128 = vpop.f32.mrf.mxu0
    %v129 = vadd.f32 0.0, %v128
    %v130 = vpop.f32.mrf.mxu0
    %131 = vdwg.mxu0
    %v134 = vunpack.c.l.b16 %v69
    %v135 = vunpack.c.l.b16 %v70
    %v136 = vpack.c.b16 %v135, %v134
    %v138 = vsel %vm87, %v136, 0
    %140 = vmatprep.subr.bf16.mxu0 0
    %141 = vmatpush1.bf16.msra.mxu0 0
    %142 = vmatprep.subr.bf16.mxu0 0
    %143 = vmatpush1.bf16.msra.mxu0 0
    %144 = vmatprep.subr.bf16.mxu0 0
    %145 = vmatpush1.bf16.msra.mxu0 0
    %146 = vmatprep.subr.bf16.mxu0 0
    %147 = vmatpush1.bf16.msra.mxu0 0
    %148 = vmatprep.subr.bf16.mxu0 0
    %149 = vmatpush1.bf16.msra.mxu0 0
    %150 = vmatprep.subr.bf16.mxu0 0
    %151 = vmatpush1.bf16.msra.mxu0 0
    %152 = vmatprep.subr.bf16.mxu0 0
    %153 = vmatpush1.bf16.msra.mxu0 0
    %154 = vmatprep.subr.bf16.mxu0 0
    %155 = vmatpush1.bf16.msra.mxu0 %v81
    %156 = vmatprep.subr.bf16.mxu0 0
    %157 = vmatpush2.bf16.msra.mxu0 0
    %158 = vmatprep.subr.bf16.mxu0 0
    %159 = vmatpush2.bf16.msra.mxu0 0
    %160 = vmatprep.subr.bf16.mxu0 0
    %161 = vmatpush2.bf16.msra.mxu0 0
    %162 = vmatprep.subr.bf16.mxu0 0
    %163 = vmatpush2.bf16.msra.mxu0 0
    %164 = vmatprep.subr.bf16.mxu0 0
    %165 = vmatpush2.bf16.msra.mxu0 0
    %166 = vmatprep.subr.bf16.mxu0 0
    %167 = vmatpush2.bf16.msra.mxu0 0
    %168 = vmatprep.subr.bf16.mxu0 0
    %169 = vmatpush2.bf16.msra.mxu0 0
    %170 = vmatprep.subr.bf16.mxu0 0
    %171 = vmatpush2.bf16.msra.mxu0 0
    %172 = vmatprep.mubr.bf16.mxu0 0
    %173 = vmatmul.mubr.bf16.gmra.mxu0 %v138
    %v174 = vpop.f32.mrf.mxu0
    %v175 = vadd.f32 0.0, %v174
    %v176 = vpop.f32.mrf.mxu0
    %v177 = vpop.f32.mrf.mxu0
    %v178 = vadd.f32 0.0, %v177
    %v179 = vpop.f32.mrf.mxu0
    %180 = vdwg.mxu0
    %v181 = vsub.f32 %v126, %v175
    %v182 = vsub.f32 %v129, %v178
    %183 = vst.msk [vmem:[#allocation2] sm:$0xff] %vm87, %v181
    %184 = vst.msk [vmem:[#allocation2 + $0x8] sm:$0xff] %vm87, %v182
    %185 = vmatprep.subr.bf16.mxu0 0
    %186 = vmatpush1.bf16.msra.mxu0 0
    %187 = vmatprep.subr.bf16.mxu0 0
    %188 = vmatpush1.bf16.msra.mxu0 0
    %189 = vmatprep.subr.bf16.mxu0 0
    %190 = vmatpush1.bf16.msra.mxu0 0
    %191 = vmatprep.subr.bf16.mxu0 0
    %192 = vmatpush1.bf16.msra.mxu0 0
    %193 = vmatprep.subr.bf16.mxu0 0
    %194 = vmatpush1.bf16.msra.mxu0 0
    %195 = vmatprep.subr.bf16.mxu0 0
    %196 = vmatpush1.bf16.msra.mxu0 0
    %197 = vmatprep.subr.bf16.mxu0 0
    %198 = vmatpush1.bf16.msra.mxu0 0
    %199 = vmatprep.subr.bf16.mxu0 0
    %200 = vmatpush1.bf16.msra.mxu0 %v77
    %201 = vmatprep.subr.bf16.mxu0 0
    %202 = vmatpush2.bf16.msra.mxu0 0
    %203 = vmatprep.subr.bf16.mxu0 0
    %204 = vmatpush2.bf16.msra.mxu0 0
    %205 = vmatprep.subr.bf16.mxu0 0
    %206 = vmatpush2.bf16.msra.mxu0 0
    %207 = vmatprep.subr.bf16.mxu0 0
    %208 = vmatpush2.bf16.msra.mxu0 0
    %209 = vmatprep.subr.bf16.mxu0 0
    %210 = vmatpush2.bf16.msra.mxu0 0
    %211 = vmatprep.subr.bf16.mxu0 0
    %212 = vmatpush2.bf16.msra.mxu0 0
    %213 = vmatprep.subr.bf16.mxu0 0
    %214 = vmatpush2.bf16.msra.mxu0 0
    %215 = vmatprep.subr.bf16.mxu0 0
    %216 = vmatpush2.bf16.msra.mxu0 0
    %217 = vmatprep.mubr.bf16.mxu0 0
    %218 = vmatmul.mubr.bf16.gmra.mxu0 %v138
    %v219 = vpop.f32.mrf.mxu0
    %v220 = vadd.f32 0.0, %v219
    %v221 = vpop.f32.mrf.mxu0
    %v222 = vpop.f32.mrf.mxu0
    %v223 = vadd.f32 0.0, %v222
    %v224 = vpop.f32.mrf.mxu0
    %225 = vdwg.mxu0
    %226 = vmatprep.subr.bf16.mxu0 0
    %227 = vmatpush1.bf16.msra.mxu0 0
    %228 = vmatprep.subr.bf16.mxu0 0
    %229 = vmatpush1.bf16.msra.mxu0 0
    %230 = vmatprep.subr.bf16.mxu0 0
    %231 = vmatpush1.bf16.msra.mxu0 0
    %232 = vmatprep.subr.bf16.mxu0 0
    %233 = vmatpush1.bf16.msra.mxu0 0
    %234 = vmatprep.subr.bf16.mxu0 0
    %235 = vmatpush1.bf16.msra.mxu0 0
    %236 = vmatprep.subr.bf16.mxu0 0
    %237 = vmatpush1.bf16.msra.mxu0 0
    %238 = vmatprep.subr.bf16.mxu0 0
    %239 = vmatpush1.bf16.msra.mxu0 0
    %240 = vmatprep.subr.bf16.mxu0 0
    %241 = vmatpush1.bf16.msra.mxu0 %v81
    %242 = vmatprep.subr.bf16.mxu0 0
    %243 = vmatpush2.bf16.msra.mxu0 0
    %244 = vmatprep.subr.bf16.mxu0 0
    %245 = vmatpush2.bf16.msra.mxu0 0
    %246 = vmatprep.subr.bf16.mxu0 0
    %247 = vmatpush2.bf16.msra.mxu0 0
    %248 = vmatprep.subr.bf16.mxu0 0
    %249 = vmatpush2.bf16.msra.mxu0 0
    %250 = vmatprep.subr.bf16.mxu0 0
    %251 = vmatpush2.bf16.msra.mxu0 0
    %252 = vmatprep.subr.bf16.mxu0 0
    %253 = vmatpush2.bf16.msra.mxu0 0
    %254 = vmatprep.subr.bf16.mxu0 0
    %255 = vmatpush2.bf16.msra.mxu0 0
    %256 = vmatprep.subr.bf16.mxu0 0
    %257 = vmatpush2.bf16.msra.mxu0 0
    %258 = vmatprep.mubr.bf16.mxu0 0
    %259 = vmatmul.mubr.bf16.gmra.mxu0 %v89
    %v260 = vpop.f32.mrf.mxu0
    %v261 = vadd.f32 %v220, %v260
    %v262 = vpop.f32.mrf.mxu0
    %v263 = vpop.f32.mrf.mxu0
    %v264 = vadd.f32 %v223, %v263
    %v265 = vpop.f32.mrf.mxu0
    %266 = vdwg.mxu0
    %267 = vst.msk [vmem:[#allocation2 + $0x10] sm:$0xff] %vm87, %v261
    %268 = vst.msk [vmem:[#allocation2 + $0x18] sm:$0xff] %vm87, %v264
    %s269 = scalar_lea.vmem [#allocation3], 32
    %v270 = vld [vmem:[%s269] sm:$0xff]
    %v271 = vld [vmem:[%s269 + $0x8] sm:$0xff]
    %v272 = vpack.c.bf16 %v271, %v270
    %s273 = scalar_lea.vmem [#allocation3], 48
    %v274 = vld [vmem:[%s273] sm:$0xff]
    %v275 = vld [vmem:[%s273 + $0x8] sm:$0xff]
    %v276 = vpack.c.bf16 %v275, %v274
    %277 = vmatprep.subr.bf16.mxu0 0
    %278 = vmatpush1.bf16.msra.mxu0 0
    %279 = vmatprep.subr.bf16.mxu0 0
    %280 = vmatpush1.bf16.msra.mxu0 0
    %281 = vmatprep.subr.bf16.mxu0 0
    %282 = vmatpush1.bf16.msra.mxu0 0
    %283 = vmatprep.subr.bf16.mxu0 0
    %284 = vmatpush1.bf16.msra.mxu0 0
    %285 = vmatprep.subr.bf16.mxu0 0
    %286 = vmatpush1.bf16.msra.mxu0 0
    %287 = vmatprep.subr.bf16.mxu0 0
    %288 = vmatpush1.bf16.msra.mxu0 0
    %289 = vmatprep.subr.bf16.mxu0 0
    %290 = vmatpush1.bf16.msra.mxu0 0
    %291 = vmatprep.subr.bf16.mxu0 0
    %292 = vmatpush1.bf16.msra.mxu0 %v272
    %293 = vmatprep.subr.bf16.mxu0 0
    %294 = vmatpush2.bf16.msra.mxu0 0
    %295 = vmatprep.subr.bf16.mxu0 0
    %296 = vmatpush2.bf16.msra.mxu0 0
    %297 = vmatprep.subr.bf16.mxu0 0
    %298 = vmatpush2.bf16.msra.mxu0 0
    %299 = vmatprep.subr.bf16.mxu0 0
    %300 = vmatpush2.bf16.msra.mxu0 0
    %301 = vmatprep.subr.bf16.mxu0 0
    %302 = vmatpush2.bf16.msra.mxu0 0
    %303 = vmatprep.subr.bf16.mxu0 0
    %304 = vmatpush2.bf16.msra.mxu0 0
    %305 = vmatprep.subr.bf16.mxu0 0
    %306 = vmatpush2.bf16.msra.mxu0 0
    %307 = vmatprep.subr.bf16.mxu0 0
    %308 = vmatpush2.bf16.msra.mxu0 0
    %309 = vmatprep.mubr.bf16.mxu0 0
    %310 = vmatmul.mubr.bf16.gmra.mxu0 %v89
    %v311 = vpop.f32.mrf.mxu0
    %v312 = vadd.f32 0.0, %v311
    %v313 = vpop.f32.mrf.mxu0
    %v314 = vpop.f32.mrf.mxu0
    %v315 = vadd.f32 0.0, %v314
    %v316 = vpop.f32.mrf.mxu0
    %317 = vdwg.mxu0
    %318 = vmatprep.subr.bf16.mxu0 0
    %319 = vmatpush1.bf16.msra.mxu0 0
    %320 = vmatprep.subr.bf16.mxu0 0
    %321 = vmatpush1.bf16.msra.mxu0 0
    %322 = vmatprep.subr.bf16.mxu0 0
    %323 = vmatpush1.bf16.msra.mxu0 0
    %324 = vmatprep.subr.bf16.mxu0 0
    %325 = vmatpush1.bf16.msra.mxu0 0
    %326 = vmatprep.subr.bf16.mxu0 0
    %327 = vmatpush1.bf16.msra.mxu0 0
    %328 = vmatprep.subr.bf16.mxu0 0
    %329 = vmatpush1.bf16.msra.mxu0 0
    %330 = vmatprep.subr.bf16.mxu0 0
    %331 = vmatpush1.bf16.msra.mxu0 0
    %332 = vmatprep.subr.bf16.mxu0 0
    %333 = vmatpush1.bf16.msra.mxu0 %v276
    %334 = vmatprep.subr.bf16.mxu0 0
    %335 = vmatpush2.bf16.msra.mxu0 0
    %336 = vmatprep.subr.bf16.mxu0 0
    %337 = vmatpush2.bf16.msra.mxu0 0
    %338 = vmatprep.subr.bf16.mxu0 0
    %339 = vmatpush2.bf16.msra.mxu0 0
    %340 = vmatprep.subr.bf16.mxu0 0
    %341 = vmatpush2.bf16.msra.mxu0 0
    %342 = vmatprep.subr.bf16.mxu0 0
    %343 = vmatpush2.bf16.msra.mxu0 0
    %344 = vmatprep.subr.bf16.mxu0 0
    %345 = vmatpush2.bf16.msra.mxu0 0
    %346 = vmatprep.subr.bf16.mxu0 0
    %347 = vmatpush2.bf16.msra.mxu0 0
    %348 = vmatprep.subr.bf16.mxu0 0
    %349 = vmatpush2.bf16.msra.mxu0 0
    %350 = vmatprep.mubr.bf16.mxu0 0
    %351 = vmatmul.mubr.bf16.gmra.mxu0 %v138
    %v352 = vpop.f32.mrf.mxu0
    %v353 = vadd.f32 0.0, %v352
    %v354 = vpop.f32.mrf.mxu0
    %v355 = vpop.f32.mrf.mxu0
    %v356 = vadd.f32 0.0, %v355
    %v357 = vpop.f32.mrf.mxu0
    %358 = vdwg.mxu0
    %v359 = vsub.f32 %v312, %v353
    %v360 = vsub.f32 %v315, %v356
    %361 = vst.msk [vmem:[#allocation2 + $0x20] sm:$0xff] %vm87, %v359
    %362 = vst.msk [vmem:[#allocation2 + $0x28] sm:$0xff] %vm87, %v360
    %363 = vmatprep.subr.bf16.mxu0 0
    %364 = vmatpush1.bf16.msra.mxu0 0
    %365 = vmatprep.subr.bf16.mxu0 0
    %366 = vmatpush1.bf16.msra.mxu0 0
    %367 = vmatprep.subr.bf16.mxu0 0
    %368 = vmatpush1.bf16.msra.mxu0 0
    %369 = vmatprep.subr.bf16.mxu0 0
    %370 = vmatpush1.bf16.msra.mxu0 0
    %371 = vmatprep.subr.bf16.mxu0 0
    %372 = vmatpush1.bf16.msra.mxu0 0
    %373 = vmatprep.subr.bf16.mxu0 0
    %374 = vmatpush1.bf16.msra.mxu0 0
    %375 = vmatprep.subr.bf16.mxu0 0
    %376 = vmatpush1.bf16.msra.mxu0 0
    %377 = vmatprep.subr.bf16.mxu0 0
    %378 = vmatpush1.bf16.msra.mxu0 %v272
    %379 = vmatprep.subr.bf16.mxu0 0
    %380 = vmatpush2.bf16.msra.mxu0 0
    %381 = vmatprep.subr.bf16.mxu0 0
    %382 = vmatpush2.bf16.msra.mxu0 0
    %383 = vmatprep.subr.bf16.mxu0 0
    %384 = vmatpush2.bf16.msra.mxu0 0
    %385 = vmatprep.subr.bf16.mxu0 0
    %386 = vmatpush2.bf16.msra.mxu0 0
    %387 = vmatprep.subr.bf16.mxu0 0
    %388 = vmatpush2.bf16.msra.mxu0 0
    %389 = vmatprep.subr.bf16.mxu0 0
    %390 = vmatpush2.bf16.msra.mxu0 0
    %391 = vmatprep.subr.bf16.mxu0 0
    %392 = vmatpush2.bf16.msra.mxu0 0
    %393 = vmatprep.subr.bf16.mxu0 0
    %394 = vmatpush2.bf16.msra.mxu0 0
    %395 = vmatprep.mubr.bf16.mxu0 0
    %396 = vmatmul.mubr.bf16.gmra.mxu0 %v138
    %v397 = vpop.f32.mrf.mxu0
    %v398 = vadd.f32 0.0, %v397
    %v399 = vpop.f32.mrf.mxu0
    %v400 = vpop.f32.mrf.mxu0
    %v401 = vadd.f32 0.0, %v400
    %v402 = vpop.f32.mrf.mxu0
    %403 = vdwg.mxu0
    %404 = vmatprep.subr.bf16.mxu0 0
    %405 = vmatpush1.bf16.msra.mxu0 0
    %406 = vmatprep.subr.bf16.mxu0 0
    %407 = vmatpush1.bf16.msra.mxu0 0
    %408 = vmatprep.subr.bf16.mxu0 0
    %409 = vmatpush1.bf16.msra.mxu0 0
    %410 = vmatprep.subr.bf16.mxu0 0
    %411 = vmatpush1.bf16.msra.mxu0 0
    %412 = vmatprep.subr.bf16.mxu0 0
    %413 = vmatpush1.bf16.msra.mxu0 0
    %414 = vmatprep.subr.bf16.mxu0 0
    %415 = vmatpush1.bf16.msra.mxu0 0
    %416 = vmatprep.subr.bf16.mxu0 0
    %417 = vmatpush1.bf16.msra.mxu0 0
    %418 = vmatprep.subr.bf16.mxu0 0
    %419 = vmatpush1.bf16.msra.mxu0 %v276
    %420 = vmatprep.subr.bf16.mxu0 0
    %421 = vmatpush2.bf16.msra.mxu0 0
    %422 = vmatprep.subr.bf16.mxu0 0
    %423 = vmatpush2.bf16.msra.mxu0 0
    %424 = vmatprep.subr.bf16.mxu0 0
    %425 = vmatpush2.bf16.msra.mxu0 0
    %426 = vmatprep.subr.bf16.mxu0 0
    %427 = vmatpush2.bf16.msra.mxu0 0
    %428 = vmatprep.subr.bf16.mxu0 0
    %429 = vmatpush2.bf16.msra.mxu0 0
    %430 = vmatprep.subr.bf16.mxu0 0
    %431 = vmatpush2.bf16.msra.mxu0 0
    %432 = vmatprep.subr.bf16.mxu0 0
    %433 = vmatpush2.bf16.msra.mxu0 0
    %434 = vmatprep.subr.bf16.mxu0 0
    %435 = vmatpush2.bf16.msra.mxu0 0
    %436 = vmatprep.mubr.bf16.mxu0 0
    %437 = vmatmul.mubr.bf16.gmra.mxu0 %v89
    %v438 = vpop.f32.mrf.mxu0
    %v439 = vadd.f32 %v398, %v438
    %v440 = vpop.f32.mrf.mxu0
    %v441 = vpop.f32.mrf.mxu0
    %v442 = vadd.f32 %v401, %v441
    %v443 = vpop.f32.mrf.mxu0
    %444 = vdwg.mxu0
    %445 = vst.msk [vmem:[#allocation2 + $0x30] sm:$0xff] %vm87, %v439
    %446 = vst.msk [vmem:[#allocation2 + $0x38] sm:$0xff] %vm87, %v442
    %v447 = vld [vmem:[#allocation2] sm:$0xff]
    %v448 = vld [vmem:[#allocation2 + $0x8] sm:$0xff]
    %v449 = vld [vmem:[#allocation2 + $0x10] sm:$0xff]
    %v450 = vld [vmem:[#allocation2 + $0x18] sm:$0xff]
    %v451 = vld [vmem:[#allocation2 + $0x20] sm:$0xff]
    %v452 = vld [vmem:[#allocation2 + $0x28] sm:$0xff]
    %v453 = vld [vmem:[#allocation2 + $0x30] sm:$0xff]
    %v454 = vld [vmem:[#allocation2 + $0x38] sm:$0xff]
    %v455 = vpack.c.bf16 %v448, %v447
    %v456 = vpack.c.bf16 %v450, %v449
    %v457 = vpack.c.bf16 %v452, %v451
    %v458 = vpack.c.bf16 %v454, %v453
    %v461 = vunpack.c.l.b16 %v71
    %v462 = vunpack.c.l.b16 %v72
    %v463 = vpack.c.b16 %v462, %v461
    %v466 = vsel %vm87, %v455, 0
    %v469 = vsel %vm87, %v456, 0
    %v472 = vsel %vm87, %v457, 0
    %v475 = vsel %vm87, %v458, 0
    %477 = vmatprep.subr.bf16.mxu0 0
    %478 = vmatpush1.bf16.msra.mxu0 0
    %479 = vmatprep.subr.bf16.mxu0 0
    %480 = vmatpush1.bf16.msra.mxu0 0
    %481 = vmatprep.subr.bf16.mxu0 0
    %482 = vmatpush1.bf16.msra.mxu0 0
    %483 = vmatprep.subr.bf16.mxu0 0
    %484 = vmatpush1.bf16.msra.mxu0 0
    %485 = vmatprep.subr.bf16.mxu0 0
    %486 = vmatpush1.bf16.msra.mxu0 0
    %487 = vmatprep.subr.bf16.mxu0 0
    %488 = vmatpush1.bf16.msra.mxu0 0
    %489 = vmatprep.subr.bf16.mxu0 0
    %490 = vmatpush1.bf16.msra.mxu0 0
    %491 = vmatprep.subr.bf16.mxu0 0
    %492 = vmatpush1.bf16.msra.mxu0 %v463
    %493 = vmatprep.subr.bf16.mxu0 0
    %494 = vmatpush2.bf16.msra.mxu0 0
    %495 = vmatprep.subr.bf16.mxu0 0
    %496 = vmatpush2.bf16.msra.mxu0 0
    %497 = vmatprep.subr.bf16.mxu0 0
    %498 = vmatpush2.bf16.msra.mxu0 0
    %499 = vmatprep.subr.bf16.mxu0 0
    %500 = vmatpush2.bf16.msra.mxu0 0
    %501 = vmatprep.subr.bf16.mxu0 0
    %502 = vmatpush2.bf16.msra.mxu0 0
    %503 = vmatprep.subr.bf16.mxu0 0
    %504 = vmatpush2.bf16.msra.mxu0 0
    %505 = vmatprep.subr.bf16.mxu0 0
    %506 = vmatpush2.bf16.msra.mxu0 0
    %507 = vmatprep.subr.bf16.mxu0 0
    %508 = vmatpush2.bf16.msra.mxu0 0
    %509 = vmatprep.mubr.bf16.mxu0 0
    %510 = vmatmul.mubr.bf16.gmra.mxu0 %v466
    %v511 = vpop.f32.mrf.mxu0
    %v512 = vadd.f32 0.0, %v511
    %v513 = vpop.f32.mrf.mxu0
    %v514 = vpop.f32.mrf.mxu0
    %v515 = vadd.f32 0.0, %v514
    %v516 = vpop.f32.mrf.mxu0
    %517 = vmatprep.mubr.bf16.mxu0 0
    %518 = vmatmul.mubr.bf16.gmra.mxu0 %v469
    %v519 = vpop.f32.mrf.mxu0
    %v520 = vadd.f32 0.0, %v519
    %v521 = vpop.f32.mrf.mxu0
    %v522 = vpop.f32.mrf.mxu0
    %v523 = vadd.f32 0.0, %v522
    %v524 = vpop.f32.mrf.mxu0
    %525 = vmatprep.mubr.bf16.mxu0 0
    %526 = vmatmul.mubr.bf16.gmra.mxu0 %v472
    %v527 = vpop.f32.mrf.mxu0
    %v528 = vadd.f32 0.0, %v527
    %v529 = vpop.f32.mrf.mxu0
    %v530 = vpop.f32.mrf.mxu0
    %v531 = vadd.f32 0.0, %v530
    %v532 = vpop.f32.mrf.mxu0
    %533 = vmatprep.mubr.bf16.mxu0 0
    %534 = vmatmul.mubr.bf16.gmra.mxu0 %v475
    %v535 = vpop.f32.mrf.mxu0
    %v536 = vadd.f32 0.0, %v535
    %v537 = vpop.f32.mrf.mxu0
    %v538 = vpop.f32.mrf.mxu0
    %v539 = vadd.f32 0.0, %v538
    %v540 = vpop.f32.mrf.mxu0
    %541 = vdwg.mxu0
    %v544 = vunpack.c.l.b16 %v73
    %v545 = vunpack.c.l.b16 %v74
    %v546 = vpack.c.b16 %v545, %v544
    %548 = vmatprep.subr.bf16.mxu0 0
    %549 = vmatpush1.bf16.msra.mxu0 0
    %550 = vmatprep.subr.bf16.mxu0 0
    %551 = vmatpush1.bf16.msra.mxu0 0
    %552 = vmatprep.subr.bf16.mxu0 0
    %553 = vmatpush1.bf16.msra.mxu0 0
    %554 = vmatprep.subr.bf16.mxu0 0
    %555 = vmatpush1.bf16.msra.mxu0 0
    %556 = vmatprep.subr.bf16.mxu0 0
    %557 = vmatpush1.bf16.msra.mxu0 0
    %558 = vmatprep.subr.bf16.mxu0 0
    %559 = vmatpush1.bf16.msra.mxu0 0
    %560 = vmatprep.subr.bf16.mxu0 0
    %561 = vmatpush1.bf16.msra.mxu0 0
    %562 = vmatprep.subr.bf16.mxu0 0
    %563 = vmatpush1.bf16.msra.mxu0 %v546
    %564 = vmatprep.subr.bf16.mxu0 0
    %565 = vmatpush2.bf16.msra.mxu0 0
    %566 = vmatprep.subr.bf16.mxu0 0
    %567 = vmatpush2.bf16.msra.mxu0 0
    %568 = vmatprep.subr.bf16.mxu0 0
    %569 = vmatpush2.bf16.msra.mxu0 0
    %570 = vmatprep.subr.bf16.mxu0 0
    %571 = vmatpush2.bf16.msra.mxu0 0
    %572 = vmatprep.subr.bf16.mxu0 0
    %573 = vmatpush2.bf16.msra.mxu0 0
    %574 = vmatprep.subr.bf16.mxu0 0
    %575 = vmatpush2.bf16.msra.mxu0 0
    %576 = vmatprep.subr.bf16.mxu0 0
    %577 = vmatpush2.bf16.msra.mxu0 0
    %578 = vmatprep.subr.bf16.mxu0 0
    %579 = vmatpush2.bf16.msra.mxu0 0
    %580 = vmatprep.mubr.bf16.mxu0 0
    %581 = vmatmul.mubr.bf16.gmra.mxu0 %v466
    %v582 = vpop.f32.mrf.mxu0
    %v583 = vadd.f32 0.0, %v582
    %v584 = vpop.f32.mrf.mxu0
    %v585 = vpop.f32.mrf.mxu0
    %v586 = vadd.f32 0.0, %v585
    %v587 = vpop.f32.mrf.mxu0
    %588 = vmatprep.mubr.bf16.mxu0 0
    %589 = vmatmul.mubr.bf16.gmra.mxu0 %v469
    %v590 = vpop.f32.mrf.mxu0
    %v591 = vadd.f32 0.0, %v590
    %v592 = vpop.f32.mrf.mxu0
    %v593 = vpop.f32.mrf.mxu0
    %v594 = vadd.f32 0.0, %v593
    %v595 = vpop.f32.mrf.mxu0
    %596 = vmatprep.mubr.bf16.mxu0 0
    %597 = vmatmul.mubr.bf16.gmra.mxu0 %v472
    %v598 = vpop.f32.mrf.mxu0
    %v599 = vadd.f32 0.0, %v598
    %v600 = vpop.f32.mrf.mxu0
    %v601 = vpop.f32.mrf.mxu0
    %v602 = vadd.f32 0.0, %v601
    %v603 = vpop.f32.mrf.mxu0
    %604 = vmatprep.mubr.bf16.mxu0 0
    %605 = vmatmul.mubr.bf16.gmra.mxu0 %v475
    %v606 = vpop.f32.mrf.mxu0
    %v607 = vadd.f32 0.0, %v606
    %v608 = vpop.f32.mrf.mxu0
    %v609 = vpop.f32.mrf.mxu0
    %v610 = vadd.f32 0.0, %v609
    %v611 = vpop.f32.mrf.mxu0
    %612 = vdwg.mxu0
    %v613 = vsub.f32 %v512, %v591
    %v614 = vsub.f32 %v515, %v594
    %v615 = vadd.f32 %v583, %v520
    %v616 = vadd.f32 %v586, %v523
    %vm619 = vcmask 1040384
    %v620 = vrot.slane %v613, 7
    %v621 = vrot.slane %v614, 7
    %v622 = vsel %vm619, %v620, %v621
    %v625 = vsel %vm619, 0.0, %v620
    %627 = vrot.lane.b32.xlu0 %v625, 1
    %v628 = vpop.permute.xlu0 %627
    %629 = vrot.lane.b32.xlu0 %v622, 1
    %v630 = vpop.permute.xlu0 %629
    %vm633 = vcmask 7168
    %v634 = vsel %vm633, 0.0, %v628
    %v635 = vsel %vm633, 0.0, %v630
    %s636 = sld [smem:[#allocation7]]
    %v637 = vstv %s636
    %v638 = vmul.f32 %v637, %v634
    %v639 = vmul.f32 %v637, %v635
    %v640 = vadd.f32 %v638, 0.0
    %v641 = vadd.f32 %v639, 0.0
    %s642 = sld [smem:[#allocation7 + $0x12]]
    %v643 = vstv %s642
    %v644 = vmul.f32 %v643, %v634
    %v645 = vmul.f32 %v643, %v635
    %v646 = vadd.f32 %v644, 0.0
    %v647 = vadd.f32 %v645, 0.0
    %s648 = sld [smem:[#allocation7 + $0x1]]
    %v649 = vstv %s648
    %v650 = vmul.f32 %v649, %v625
    %v651 = vmul.f32 %v649, %v622
    %v652 = vadd.f32 %v640, %v650
    %v653 = vadd.f32 %v641, %v651
    %s654 = sld [smem:[#allocation7 + $0x13]]
    %v655 = vstv %s654
    %v656 = vmul.f32 %v655, %v625
    %v657 = vmul.f32 %v655, %v622
    %v658 = vadd.f32 %v646, %v656
    %v659 = vadd.f32 %v647, %v657
    %660 = vrot.lane.b32.xlu0 %v625, 127
    %v661 = vpop.permute.xlu0 %660
    %662 = vrot.lane.b32.xlu0 %v622, 127
    %v663 = vpop.permute.xlu0 %662
    %vm666 = vcmask 121856
    %v667 = vsel %vm666, %v661, 0.0
    %v668 = vsel %vm666, %v663, 0.0
    %s669 = sld [smem:[#allocation7 + $0x2]]
    %v670 = vstv %s669
    %v671 = vmul.f32 %v670, %v667
    %v672 = vmul.f32 %v670, %v668
    %v673 = vadd.f32 %v652, %v671
    %v674 = vadd.f32 %v653, %v672
    %s675 = sld [smem:[#allocation7 + $0x14]]
    %v676 = vstv %s675
    %v677 = vmul.f32 %v676, %v667
    %v678 = vmul.f32 %v676, %v668
    %v679 = vadd.f32 %v658, %v677
    %v680 = vadd.f32 %v659, %v678
    %681 = vrot.lane.b32.xlu0 %v613, 1
    %v682 = vpop.permute.xlu0 %681
    %683 = vrot.lane.b32.xlu0 %v614, 1
    %v684 = vpop.permute.xlu0 %683
    %v687 = vsel %vm633, 0.0, %v682
    %v688 = vsel %vm633, 0.0, %v684
    %s689 = sld [smem:[#allocation7 + $0x3]]
    %v690 = vstv %s689
    %v691 = vmul.f32 %v690, %v687
    %v692 = vmul.f32 %v690, %v688
    %v693 = vadd.f32 %v673, %v691
    %v694 = vadd.f32 %v674, %v692
    %s695 = sld [smem:[#allocation7 + $0x15]]
    %v696 = vstv %s695
    %v697 = vmul.f32 %v696, %v687
    %v698 = vmul.f32 %v696, %v688
    %v699 = vadd.f32 %v679, %v697
    %v700 = vadd.f32 %v680, %v698
    %s701 = sld [smem:[#allocation7 + $0x4]]
    %v702 = vstv %s701
    %v703 = vmul.f32 %v702, %v613
    %v704 = vmul.f32 %v702, %v614
    %v705 = vadd.f32 %v693, %v703
    %v706 = vadd.f32 %v694, %v704
    %s707 = sld [smem:[#allocation7 + $0x16]]
    %v708 = vstv %s707
    %v709 = vmul.f32 %v708, %v613
    %v710 = vmul.f32 %v708, %v614
    %v711 = vadd.f32 %v699, %v709
    %v712 = vadd.f32 %v700, %v710
    %713 = vrot.lane.b32.xlu0 %v613, 127
    %v714 = vpop.permute.xlu0 %713
    %715 = vrot.lane.b32.xlu0 %v614, 127
    %v716 = vpop.permute.xlu0 %715
    %v719 = vsel %vm666, %v714, 0.0
    %v720 = vsel %vm666, %v716, 0.0
    %s721 = sld [smem:[#allocation7 + $0x5]]
    %v722 = vstv %s721
    %v723 = vmul.f32 %v722, %v719
    %v724 = vmul.f32 %v722, %v720
    %v725 = vadd.f32 %v705, %v723
    %v726 = vadd.f32 %v706, %v724
    %s727 = sld [smem:[#allocation7 + $0x17]]
    %v728 = vstv %s727
    %v729 = vmul.f32 %v728, %v719
    %v730 = vmul.f32 %v728, %v720
    %v731 = vadd.f32 %v711, %v729
    %v732 = vadd.f32 %v712, %v730
    %vm733 = vcmask 1046528
    %v734 = vrot.slane %v613, 1
    %v735 = vrot.slane %v614, 1
    %v736 = vsel %vm733, %v734, %v735
    %v739 = vsel %vm733, %v735, 0.0
    %741 = vrot.lane.b32.xlu0 %v736, 1
    %v742 = vpop.permute.xlu0 %741
    %743 = vrot.lane.b32.xlu0 %v739, 1
    %v744 = vpop.permute.xlu0 %743
    %v747 = vsel %vm633, 0.0, %v742
    %v748 = vsel %vm633, 0.0, %v744
    %s749 = sld [smem:[#allocation7 + $0x6]]
    %v750 = vstv %s749
    %v751 = vmul.f32 %v750, %v747
    %v752 = vmul.f32 %v750, %v748
    %v753 = vadd.f32 %v725, %v751
    %v754 = vadd.f32 %v726, %v752
    %s755 = sld [smem:[#allocation7 + $0x18]]
    %v756 = vstv %s755
    %v757 = vmul.f32 %v756, %v747
    %v758 = vmul.f32 %v756, %v748
    %v759 = vadd.f32 %v731, %v757
    %v760 = vadd.f32 %v732, %v758
    %s761 = sld [smem:[#allocation7 + $0x7]]
    %v762 = vstv %s761
    %v763 = vmul.f32 %v762, %v736
    %v764 = vmul.f32 %v762, %v739
    %v765 = vadd.f32 %v753, %v763
    %v766 = vadd.f32 %v754, %v764
    %s767 = sld [smem:[#allocation7 + $0x19]]
    %v768 = vstv %s767
    %v769 = vmul.f32 %v768, %v736
    %v770 = vmul.f32 %v768, %v739
    %v771 = vadd.f32 %v759, %v769
    %v772 = vadd.f32 %v760, %v770
    %773 = vrot.lane.b32.xlu0 %v736, 127
    %v774 = vpop.permute.xlu0 %773
    %775 = vrot.lane.b32.xlu0 %v739, 127
    %v776 = vpop.permute.xlu0 %775
    %v779 = vsel %vm666, %v774, 0.0
    %v780 = vsel %vm666, %v776, 0.0
    %s781 = sld [smem:[#allocation7 + $0x8]]
    %v782 = vstv %s781
    %v783 = vmul.f32 %v782, %v779
    %v784 = vmul.f32 %v782, %v780
    %v785 = vadd.f32 %v765, %v783
    %v786 = vadd.f32 %v766, %v784
    %s787 = sld [smem:[#allocation7 + $0x1a]]
    %v788 = vstv %s787
    %v789 = vmul.f32 %v788, %v779
    %v790 = vmul.f32 %v788, %v780
    %v791 = vadd.f32 %v771, %v789
    %v792 = vadd.f32 %v772, %v790
    %v795 = vrot.slane %v615, 7
    %v796 = vrot.slane %v616, 7
    %v797 = vsel %vm619, %v795, %v796
    %v800 = vsel %vm619, 0.0, %v795
    %802 = vrot.lane.b32.xlu0 %v800, 1
    %v803 = vpop.permute.xlu0 %802
    %804 = vrot.lane.b32.xlu0 %v797, 1
    %v805 = vpop.permute.xlu0 %804
    %v808 = vsel %vm633, 0.0, %v803
    %v809 = vsel %vm633, 0.0, %v805
    %s810 = sld [smem:[#allocation7 + $0x9]]
    %v811 = vstv %s810
    %v812 = vmul.f32 %v811, %v808
    %v813 = vmul.f32 %v811, %v809
    %v814 = vadd.f32 %v812, 0.0
    %v815 = vadd.f32 %v813, 0.0
    %s816 = sld [smem:[#allocation7 + $0x1b]]
    %v817 = vstv %s816
    %v818 = vmul.f32 %v817, %v808
    %v819 = vmul.f32 %v817, %v809
    %v820 = vadd.f32 %v818, 0.0
    %v821 = vadd.f32 %v819, 0.0
    %s822 = sld [smem:[#allocation7 + $0xa]]
    %v823 = vstv %s822
    %v824 = vmul.f32 %v823, %v800
    %v825 = vmul.f32 %v823, %v797
    %v826 = vadd.f32 %v814, %v824
    %v827 = vadd.f32 %v815, %v825
    %s828 = sld [smem:[#allocation7 + $0x1c]]
    %v829 = vstv %s828
    %v830 = vmul.f32 %v829, %v800
    %v831 = vmul.f32 %v829, %v797
    %v832 = vadd.f32 %v820, %v830
    %v833 = vadd.f32 %v821, %v831
    %834 = vrot.lane.b32.xlu0 %v800, 127
    %v835 = vpop.permute.xlu0 %834
    %836 = vrot.lane.b32.xlu0 %v797, 127
    %v837 = vpop.permute.xlu0 %836
    %v840 = vsel %vm666, %v835, 0.0
    %v841 = vsel %vm666, %v837, 0.0
    %s842 = sld [smem:[#allocation7 + $0xb]]
    %v843 = vstv %s842
    %v844 = vmul.f32 %v843, %v840
    %v845 = vmul.f32 %v843, %v841
    %v846 = vadd.f32 %v826, %v844
    %v847 = vadd.f32 %v827, %v845
    %s848 = sld [smem:[#allocation7 + $0x1d]]
    %v849 = vstv %s848
    %v850 = vmul.f32 %v849, %v840
    %v851 = vmul.f32 %v849, %v841
    %v852 = vadd.f32 %v832, %v850
    %v853 = vadd.f32 %v833, %v851
    %854 = vrot.lane.b32.xlu0 %v615, 1
    %v855 = vpop.permute.xlu0 %854
    %856 = vrot.lane.b32.xlu0 %v616, 1
    %v857 = vpop.permute.xlu0 %856
    %v860 = vsel %vm633, 0.0, %v855
    %v861 = vsel %vm633, 0.0, %v857
    %s862 = sld [smem:[#allocation7 + $0xc]]
    %v863 = vstv %s862
    %v864 = vmul.f32 %v863, %v860
    %v865 = vmul.f32 %v863, %v861
    %v866 = vadd.f32 %v846, %v864
    %v867 = vadd.f32 %v847, %v865
    %s868 = sld [smem:[#allocation7 + $0x1e]]
    %v869 = vstv %s868
    %v870 = vmul.f32 %v869, %v860
    %v871 = vmul.f32 %v869, %v861
    %v872 = vadd.f32 %v852, %v870
    %v873 = vadd.f32 %v853, %v871
    %s874 = sld [smem:[#allocation7 + $0xd]]
    %v875 = vstv %s874
    %v876 = vmul.f32 %v875, %v615
    %v877 = vmul.f32 %v875, %v616
    %v878 = vadd.f32 %v866, %v876
    %v879 = vadd.f32 %v867, %v877
    %s880 = sld [smem:[#allocation7 + $0x1f]]
    %v881 = vstv %s880
    %v882 = vmul.f32 %v881, %v615
    %v883 = vmul.f32 %v881, %v616
    %v884 = vadd.f32 %v872, %v882
    %v885 = vadd.f32 %v873, %v883
    %886 = vrot.lane.b32.xlu0 %v615, 127
    %v887 = vpop.permute.xlu0 %886
    %888 = vrot.lane.b32.xlu0 %v616, 127
    %v889 = vpop.permute.xlu0 %888
    %v892 = vsel %vm666, %v887, 0.0
    %v893 = vsel %vm666, %v889, 0.0
    %s894 = sld [smem:[#allocation7 + $0xe]]
    %v895 = vstv %s894
    %v896 = vmul.f32 %v895, %v892
    %v897 = vmul.f32 %v895, %v893
    %v898 = vadd.f32 %v878, %v896
    %v899 = vadd.f32 %v879, %v897
    %s900 = sld [smem:[#allocation7 + $0x20]]
    %v901 = vstv %s900
    %v902 = vmul.f32 %v901, %v892
    %v903 = vmul.f32 %v901, %v893
    %v904 = vadd.f32 %v884, %v902
    %v905 = vadd.f32 %v885, %v903
    %v906 = vrot.slane %v615, 1
    %v907 = vrot.slane %v616, 1
    %v908 = vsel %vm733, %v906, %v907
    %v911 = vsel %vm733, %v907, 0.0
    %913 = vrot.lane.b32.xlu0 %v908, 1
    %v914 = vpop.permute.xlu0 %913
    %915 = vrot.lane.b32.xlu0 %v911, 1
    %v916 = vpop.permute.xlu0 %915
    %v919 = vsel %vm633, 0.0, %v914
    %v920 = vsel %vm633, 0.0, %v916
    %s921 = sld [smem:[#allocation7 + $0xf]]
    %v922 = vstv %s921
    %v923 = vmul.f32 %v922, %v919
    %v924 = vmul.f32 %v922, %v920
    %v925 = vadd.f32 %v898, %v923
    %v926 = vadd.f32 %v899, %v924
    %s927 = sld [smem:[#allocation7 + $0x21]]
    %v928 = vstv %s927
    %v929 = vmul.f32 %v928, %v919
    %v930 = vmul.f32 %v928, %v920
    %v931 = vadd.f32 %v904, %v929
    %v932 = vadd.f32 %v905, %v930
    %s933 = sld [smem:[#allocation7 + $0x10]]
    %v934 = vstv %s933
    %v935 = vmul.f32 %v934, %v908
    %v936 = vmul.f32 %v934, %v911
    %v937 = vadd.f32 %v925, %v935
    %v938 = vadd.f32 %v926, %v936
    %s939 = sld [smem:[#allocation7 + $0x22]]
    %v940 = vstv %s939
    %v941 = vmul.f32 %v940, %v908
    %v942 = vmul.f32 %v940, %v911
    %v943 = vadd.f32 %v931, %v941
    %v944 = vadd.f32 %v932, %v942
    %945 = vrot.lane.b32.xlu0 %v908, 127
    %v946 = vpop.permute.xlu0 %945
    %947 = vrot.lane.b32.xlu0 %v911, 127
    %v948 = vpop.permute.xlu0 %947
    %v951 = vsel %vm666, %v946, 0.0
    %v952 = vsel %vm666, %v948, 0.0
    %s953 = sld [smem:[#allocation7 + $0x11]]
    %v954 = vstv %s953
    %v955 = vmul.f32 %v954, %v951
    %v956 = vmul.f32 %v954, %v952
    %v957 = vadd.f32 %v937, %v955
    %v958 = vadd.f32 %v938, %v956
    %s959 = sld [smem:[#allocation7 + $0x23]]
    %v960 = vstv %s959
    %v961 = vmul.f32 %v960, %v951
    %v962 = vmul.f32 %v960, %v952
    %v963 = vadd.f32 %v943, %v961
    %v964 = vadd.f32 %v944, %v962
    %v965 = vadd.f32 %v785, %v957
    %v966 = vadd.f32 %v786, %v958
    %s967 = sld [smem:[#allocation8]]
    %v968 = vstv %s967
    %v969 = vadd.f32 %v965, %v968
    %v970 = vadd.f32 %v966, %v968
    %971 = vst.msk [vmem:[#allocation2] sm:$0xff] %vm87, %v969
    %972 = vst.msk [vmem:[#allocation2 + $0x8] sm:$0xff] %vm87, %v970
    %v973 = vadd.f32 %v791, %v963
    %v974 = vadd.f32 %v792, %v964
    %s975 = sld [smem:[#allocation8 + $0x1]]
    %v976 = vstv %s975
    %v977 = vadd.f32 %v973, %v976
    %v978 = vadd.f32 %v974, %v976
    %979 = vst.msk [vmem:[#allocation2 + $0x10] sm:$0xff] %vm87, %v977
    %980 = vst.msk [vmem:[#allocation2 + $0x18] sm:$0xff] %vm87, %v978
    %v981 = vsub.f32 %v528, %v607
    %v982 = vsub.f32 %v531, %v610
    %v983 = vadd.f32 %v599, %v536
    %v984 = vadd.f32 %v602, %v539
    %v987 = vrot.slane %v981, 7
    %v988 = vrot.slane %v982, 7
    %v989 = vsel %vm619, %v987, %v988
    %v992 = vsel %vm619, 0.0, %v987
    %994 = vrot.lane.b32.xlu0 %v992, 1
    %v995 = vpop.permute.xlu0 %994
    %996 = vrot.lane.b32.xlu0 %v989, 1
    %v997 = vpop.permute.xlu0 %996
    %v1000 = vsel %vm633, 0.0, %v995
    %v1001 = vsel %vm633, 0.0, %v997
    %s1002 = sld [smem:[#allocation7]]
    %v1003 = vstv %s1002
    %v1004 = vmul.f32 %v1003, %v1000
    %v1005 = vmul.f32 %v1003, %v1001
    %v1006 = vadd.f32 %v1004, 0.0
    %v1007 = vadd.f32 %v1005, 0.0
    %s1008 = sld [smem:[#allocation7 + $0x12]]
    %v1009 = vstv %s1008
    %v1010 = vmul.f32 %v1009, %v1000
    %v1011 = vmul.f32 %v1009, %v1001
    %v1012 = vadd.f32 %v1010, 0.0
    %v1013 = vadd.f32 %v1011, 0.0
    %s1014 = sld [smem:[#allocation7 + $0x1]]
    %v1015 = vstv %s1014
    %v1016 = vmul.f32 %v1015, %v992
    %v1017 = vmul.f32 %v1015, %v989
    %v1018 = vadd.f32 %v1006, %v1016
    %v1019 = vadd.f32 %v1007, %v1017
    %s1020 = sld [smem:[#allocation7 + $0x13]]
    %v1021 = vstv %s1020
    %v1022 = vmul.f32 %v1021, %v992
    %v1023 = vmul.f32 %v1021, %v989
    %v1024 = vadd.f32 %v1012, %v1022
    %v1025 = vadd.f32 %v1013, %v1023
    %1026 = vrot.lane.b32.xlu0 %v992, 127
    %v1027 = vpop.permute.xlu0 %1026
    %1028 = vrot.lane.b32.xlu0 %v989, 127
    %v1029 = vpop.permute.xlu0 %1028
    %v1032 = vsel %vm666, %v1027, 0.0
    %v1033 = vsel %vm666, %v1029, 0.0
    %s1034 = sld [smem:[#allocation7 + $0x2]]
    %v1035 = vstv %s1034
    %v1036 = vmul.f32 %v1035, %v1032
    %v1037 = vmul.f32 %v1035, %v1033
    %v1038 = vadd.f32 %v1018, %v1036
    %v1039 = vadd.f32 %v1019, %v1037
    %s1040 = sld [smem:[#allocation7 + $0x14]]
    %v1041 = vstv %s1040
    %v1042 = vmul.f32 %v1041, %v1032
    %v1043 = vmul.f32 %v1041, %v1033
    %v1044 = vadd.f32 %v1024, %v1042
    %v1045 = vadd.f32 %v1025, %v1043
    %1046 = vrot.lane.b32.xlu0 %v981, 1
    %v1047 = vpop.permute.xlu0 %1046
    %1048 = vrot.lane.b32.xlu0 %v982, 1
    %v1049 = vpop.permute.xlu0 %1048
    %v1052 = vsel %vm633, 0.0, %v1047
    %v1053 = vsel %vm633, 0.0, %v1049
    %s1054 = sld [smem:[#allocation7 + $0x3]]
    %v1055 = vstv %s1054
    %v1056 = vmul.f32 %v1055, %v1052
    %v1057 = vmul.f32 %v1055, %v1053
    %v1058 = vadd.f32 %v1038, %v1056
    %v1059 = vadd.f32 %v1039, %v1057
    %s1060 = sld [smem:[#allocation7 + $0x15]]
    %v1061 = vstv %s1060
    %v1062 = vmul.f32 %v1061, %v1052
    %v1063 = vmul.f32 %v1061, %v1053
    %v1064 = vadd.f32 %v1044, %v1062
    %v1065 = vadd.f32 %v1045, %v1063
    %s1066 = sld [smem:[#allocation7 + $0x4]]
    %v1067 = vstv %s1066
    %v1068 = vmul.f32 %v1067, %v981
    %v1069 = vmul.f32 %v1067, %v982
    %v1070 = vadd.f32 %v1058, %v1068
    %v1071 = vadd.f32 %v1059, %v1069
    %s1072 = sld [smem:[#allocation7 + $0x16]]
    %v1073 = vstv %s1072
    %v1074 = vmul.f32 %v1073, %v981
    %v1075 = vmul.f32 %v1073, %v982
    %v1076 = vadd.f32 %v1064, %v1074
    %v1077 = vadd.f32 %v1065, %v1075
    %1078 = vrot.lane.b32.xlu0 %v981, 127
    %v1079 = vpop.permute.xlu0 %1078
    %1080 = vrot.lane.b32.xlu0 %v982, 127
    %v1081 = vpop.permute.xlu0 %1080
    %v1084 = vsel %vm666, %v1079, 0.0
    %v1085 = vsel %vm666, %v1081, 0.0
    %s1086 = sld [smem:[#allocation7 + $0x5]]
    %v1087 = vstv %s1086
    %v1088 = vmul.f32 %v1087, %v1084
    %v1089 = vmul.f32 %v1087, %v1085
    %v1090 = vadd.f32 %v1070, %v1088
    %v1091 = vadd.f32 %v1071, %v1089
    %s1092 = sld [smem:[#allocation7 + $0x17]]
    %v1093 = vstv %s1092
    %v1094 = vmul.f32 %v1093, %v1084
    %v1095 = vmul.f32 %v1093, %v1085
    %v1096 = vadd.f32 %v1076, %v1094
    %v1097 = vadd.f32 %v1077, %v1095
    %v1098 = vrot.slane %v981, 1
    %v1099 = vrot.slane %v982, 1
    %v1100 = vsel %vm733, %v1098, %v1099
    %v1103 = vsel %vm733, %v1099, 0.0
    %1105 = vrot.lane.b32.xlu0 %v1100, 1
    %v1106 = vpop.permute.xlu0 %1105
    %1107 = vrot.lane.b32.xlu0 %v1103, 1
    %v1108 = vpop.permute.xlu0 %1107
    %v1111 = vsel %vm633, 0.0, %v1106
    %v1112 = vsel %vm633, 0.0, %v1108
    %s1113 = sld [smem:[#allocation7 + $0x6]]
    %v1114 = vstv %s1113
    %v1115 = vmul.f32 %v1114, %v1111
    %v1116 = vmul.f32 %v1114, %v1112
    %v1117 = vadd.f32 %v1090, %v1115
    %v1118 = vadd.f32 %v1091, %v1116
    %s1119 = sld [smem:[#allocation7 + $0x18]]
    %v1120 = vstv %s1119
    %v1121 = vmul.f32 %v1120, %v1111
    %v1122 = vmul.f32 %v1120, %v1112
    %v1123 = vadd.f32 %v1096, %v1121
    %v1124 = vadd.f32 %v1097, %v1122
    %s1125 = sld [smem:[#allocation7 + $0x7]]
    %v1126 = vstv %s1125
    %v1127 = vmul.f32 %v1126, %v1100
    %v1128 = vmul.f32 %v1126, %v1103
    %v1129 = vadd.f32 %v1117, %v1127
    %v1130 = vadd.f32 %v1118, %v1128
    %s1131 = sld [smem:[#allocation7 + $0x19]]
    %v1132 = vstv %s1131
    %v1133 = vmul.f32 %v1132, %v1100
    %v1134 = vmul.f32 %v1132, %v1103
    %v1135 = vadd.f32 %v1123, %v1133
    %v1136 = vadd.f32 %v1124, %v1134
    %1137 = vrot.lane.b32.xlu0 %v1100, 127
    %v1138 = vpop.permute.xlu0 %1137
    %1139 = vrot.lane.b32.xlu0 %v1103, 127
    %v1140 = vpop.permute.xlu0 %1139
    %v1143 = vsel %vm666, %v1138, 0.0
    %v1144 = vsel %vm666, %v1140, 0.0
    %s1145 = sld [smem:[#allocation7 + $0x8]]
    %v1146 = vstv %s1145
    %v1147 = vmul.f32 %v1146, %v1143
    %v1148 = vmul.f32 %v1146, %v1144
    %v1149 = vadd.f32 %v1129, %v1147
    %v1150 = vadd.f32 %v1130, %v1148
    %s1151 = sld [smem:[#allocation7 + $0x1a]]
    %v1152 = vstv %s1151
    %v1153 = vmul.f32 %v1152, %v1143
    %v1154 = vmul.f32 %v1152, %v1144
    %v1155 = vadd.f32 %v1135, %v1153
    %v1156 = vadd.f32 %v1136, %v1154
    %v1159 = vrot.slane %v983, 7
    %v1160 = vrot.slane %v984, 7
    %v1161 = vsel %vm619, %v1159, %v1160
    %v1164 = vsel %vm619, 0.0, %v1159
    %1166 = vrot.lane.b32.xlu0 %v1164, 1
    %v1167 = vpop.permute.xlu0 %1166
    %1168 = vrot.lane.b32.xlu0 %v1161, 1
    %v1169 = vpop.permute.xlu0 %1168
    %v1172 = vsel %vm633, 0.0, %v1167
    %v1173 = vsel %vm633, 0.0, %v1169
    %s1174 = sld [smem:[#allocation7 + $0x9]]
    %v1175 = vstv %s1174
    %v1176 = vmul.f32 %v1175, %v1172
    %v1177 = vmul.f32 %v1175, %v1173
    %v1178 = vadd.f32 %v1176, 0.0
    %v1179 = vadd.f32 %v1177, 0.0
    %s1180 = sld [smem:[#allocation7 + $0x1b]]
    %v1181 = vstv %s1180
    %v1182 = vmul.f32 %v1181, %v1172
    %v1183 = vmul.f32 %v1181, %v1173
    %v1184 = vadd.f32 %v1182, 0.0
    %v1185 = vadd.f32 %v1183, 0.0
    %s1186 = sld [smem:[#allocation7 + $0xa]]
    %v1187 = vstv %s1186
    %v1188 = vmul.f32 %v1187, %v1164
    %v1189 = vmul.f32 %v1187, %v1161
    %v1190 = vadd.f32 %v1178, %v1188
    %v1191 = vadd.f32 %v1179, %v1189
    %s1192 = sld [smem:[#allocation7 + $0x1c]]
    %v1193 = vstv %s1192
    %v1194 = vmul.f32 %v1193, %v1164
    %v1195 = vmul.f32 %v1193, %v1161
    %v1196 = vadd.f32 %v1184, %v1194
    %v1197 = vadd.f32 %v1185, %v1195
    %1198 = vrot.lane.b32.xlu0 %v1164, 127
    %v1199 = vpop.permute.xlu0 %1198
    %1200 = vrot.lane.b32.xlu0 %v1161, 127
    %v1201 = vpop.permute.xlu0 %1200
    %v1204 = vsel %vm666, %v1199, 0.0
    %v1205 = vsel %vm666, %v1201, 0.0
    %s1206 = sld [smem:[#allocation7 + $0xb]]
    %v1207 = vstv %s1206
    %v1208 = vmul.f32 %v1207, %v1204
    %v1209 = vmul.f32 %v1207, %v1205
    %v1210 = vadd.f32 %v1190, %v1208
    %v1211 = vadd.f32 %v1191, %v1209
    %s1212 = sld [smem:[#allocation7 + $0x1d]]
    %v1213 = vstv %s1212
    %v1214 = vmul.f32 %v1213, %v1204
    %v1215 = vmul.f32 %v1213, %v1205
    %v1216 = vadd.f32 %v1196, %v1214
    %v1217 = vadd.f32 %v1197, %v1215
    %1218 = vrot.lane.b32.xlu0 %v983, 1
    %v1219 = vpop.permute.xlu0 %1218
    %1220 = vrot.lane.b32.xlu0 %v984, 1
    %v1221 = vpop.permute.xlu0 %1220
    %v1224 = vsel %vm633, 0.0, %v1219
    %v1225 = vsel %vm633, 0.0, %v1221
    %s1226 = sld [smem:[#allocation7 + $0xc]]
    %v1227 = vstv %s1226
    %v1228 = vmul.f32 %v1227, %v1224
    %v1229 = vmul.f32 %v1227, %v1225
    %v1230 = vadd.f32 %v1210, %v1228
    %v1231 = vadd.f32 %v1211, %v1229
    %s1232 = sld [smem:[#allocation7 + $0x1e]]
    %v1233 = vstv %s1232
    %v1234 = vmul.f32 %v1233, %v1224
    %v1235 = vmul.f32 %v1233, %v1225
    %v1236 = vadd.f32 %v1216, %v1234
    %v1237 = vadd.f32 %v1217, %v1235
    %s1238 = sld [smem:[#allocation7 + $0xd]]
    %v1239 = vstv %s1238
    %v1240 = vmul.f32 %v1239, %v983
    %v1241 = vmul.f32 %v1239, %v984
    %v1242 = vadd.f32 %v1230, %v1240
    %v1243 = vadd.f32 %v1231, %v1241
    %s1244 = sld [smem:[#allocation7 + $0x1f]]
    %v1245 = vstv %s1244
    %v1246 = vmul.f32 %v1245, %v983
    %v1247 = vmul.f32 %v1245, %v984
    %v1248 = vadd.f32 %v1236, %v1246
    %v1249 = vadd.f32 %v1237, %v1247
    %1250 = vrot.lane.b32.xlu0 %v983, 127
    %v1251 = vpop.permute.xlu0 %1250
    %1252 = vrot.lane.b32.xlu0 %v984, 127
    %v1253 = vpop.permute.xlu0 %1252
    %v1256 = vsel %vm666, %v1251, 0.0
    %v1257 = vsel %vm666, %v1253, 0.0
    %s1258 = sld [smem:[#allocation7 + $0xe]]
    %v1259 = vstv %s1258
    %v1260 = vmul.f32 %v1259, %v1256
    %v1261 = vmul.f32 %v1259, %v1257
    %v1262 = vadd.f32 %v1242, %v1260
    %v1263 = vadd.f32 %v1243, %v1261
    %s1264 = sld [smem:[#allocation7 + $0x20]]
    %v1265 = vstv %s1264
    %v1266 = vmul.f32 %v1265, %v1256
    %v1267 = vmul.f32 %v1265, %v1257
    %v1268 = vadd.f32 %v1248, %v1266
    %v1269 = vadd.f32 %v1249, %v1267
    %v1270 = vrot.slane %v983, 1
    %v1271 = vrot.slane %v984, 1
    %v1272 = vsel %vm733, %v1270, %v1271
    %v1275 = vsel %vm733, %v1271, 0.0
    %1277 = vrot.lane.b32.xlu0 %v1272, 1
    %v1278 = vpop.permute.xlu0 %1277
    %1279 = vrot.lane.b32.xlu0 %v1275, 1
    %v1280 = vpop.permute.xlu0 %1279
    %v1283 = vsel %vm633, 0.0, %v1278
    %v1284 = vsel %vm633, 0.0, %v1280
    %s1285 = sld [smem:[#allocation7 + $0xf]]
    %v1286 = vstv %s1285
    %v1287 = vmul.f32 %v1286, %v1283
    %v1288 = vmul.f32 %v1286, %v1284
    %v1289 = vadd.f32 %v1262, %v1287
    %v1290 = vadd.f32 %v1263, %v1288
    %s1291 = sld [smem:[#allocation7 + $0x21]]
    %v1292 = vstv %s1291
    %v1293 = vmul.f32 %v1292, %v1283
    %v1294 = vmul.f32 %v1292, %v1284
    %v1295 = vadd.f32 %v1268, %v1293
    %v1296 = vadd.f32 %v1269, %v1294
    %s1297 = sld [smem:[#allocation7 + $0x10]]
    %v1298 = vstv %s1297
    %v1299 = vmul.f32 %v1298, %v1272
    %v1300 = vmul.f32 %v1298, %v1275
    %v1301 = vadd.f32 %v1289, %v1299
    %v1302 = vadd.f32 %v1290, %v1300
    %s1303 = sld [smem:[#allocation7 + $0x22]]
    %v1304 = vstv %s1303
    %v1305 = vmul.f32 %v1304, %v1272
    %v1306 = vmul.f32 %v1304, %v1275
    %v1307 = vadd.f32 %v1295, %v1305
    %v1308 = vadd.f32 %v1296, %v1306
    %1309 = vrot.lane.b32.xlu0 %v1272, 127
    %v1310 = vpop.permute.xlu0 %1309
    %1311 = vrot.lane.b32.xlu0 %v1275, 127
    %v1312 = vpop.permute.xlu0 %1311
    %v1315 = vsel %vm666, %v1310, 0.0
    %v1316 = vsel %vm666, %v1312, 0.0
    %s1317 = sld [smem:[#allocation7 + $0x11]]
    %v1318 = vstv %s1317
    %v1319 = vmul.f32 %v1318, %v1315
    %v1320 = vmul.f32 %v1318, %v1316
    %v1321 = vadd.f32 %v1301, %v1319
    %v1322 = vadd.f32 %v1302, %v1320
    %s1323 = sld [smem:[#allocation7 + $0x23]]
    %v1324 = vstv %s1323
    %v1325 = vmul.f32 %v1324, %v1315
    %v1326 = vmul.f32 %v1324, %v1316
    %v1327 = vadd.f32 %v1307, %v1325
    %v1328 = vadd.f32 %v1308, %v1326
    %v1329 = vadd.f32 %v1149, %v1321
    %v1330 = vadd.f32 %v1150, %v1322
    %s1331 = sld [smem:[#allocation8]]
    %v1332 = vstv %s1331
    %v1333 = vadd.f32 %v1329, %v1332
    %v1334 = vadd.f32 %v1330, %v1332
    %1335 = vst.msk [vmem:[#allocation2 + $0x20] sm:$0xff] %vm87, %v1333
    %1336 = vst.msk [vmem:[#allocation2 + $0x28] sm:$0xff] %vm87, %v1334
    %v1337 = vadd.f32 %v1155, %v1327
    %v1338 = vadd.f32 %v1156, %v1328
    %s1339 = sld [smem:[#allocation8 + $0x1]]
    %v1340 = vstv %s1339
    %v1341 = vadd.f32 %v1337, %v1340
    %v1342 = vadd.f32 %v1338, %v1340
    %1343 = vst.msk [vmem:[#allocation2 + $0x30] sm:$0xff] %vm87, %v1341
    %1344 = vst.msk [vmem:[#allocation2 + $0x38] sm:$0xff] %vm87, %v1342
    %v1345 = vld [vmem:[#allocation2] sm:$0xff]
    %v1346 = vld [vmem:[#allocation2 + $0x8] sm:$0xff]
    %v1347 = vpack.c.bf16 %v1346, %v1345
    %v1348 = vld [vmem:[#allocation2 + $0x10] sm:$0xff]
    %v1349 = vld [vmem:[#allocation2 + $0x18] sm:$0xff]
    %v1350 = vpack.c.bf16 %v1349, %v1348
    %1351 = vmatprep.subr.bf16.mxu0 0
    %1352 = vmatpush1.bf16.msra.mxu0 0
    %1353 = vmatprep.subr.bf16.mxu0 0
    %1354 = vmatpush1.bf16.msra.mxu0 0
    %1355 = vmatprep.subr.bf16.mxu0 0
    %1356 = vmatpush1.bf16.msra.mxu0 0
    %1357 = vmatprep.subr.bf16.mxu0 0
    %1358 = vmatpush1.bf16.msra.mxu0 0
    %1359 = vmatprep.subr.bf16.mxu0 0
    %1360 = vmatpush1.bf16.msra.mxu0 0
    %1361 = vmatprep.subr.bf16.mxu0 0
    %1362 = vmatpush1.bf16.msra.mxu0 0
    %1363 = vmatprep.subr.bf16.mxu0 0
    %1364 = vmatpush1.bf16.msra.mxu0 0
    %1365 = vmatprep.subr.bf16.mxu0 0
    %1366 = vmatpush1.bf16.msra.mxu0 %v1350
    %1367 = vmatprep.subr.bf16.mxu0 0
    %1368 = vmatpush2.bf16.msra.mxu0 0
    %1369 = vmatprep.subr.bf16.mxu0 0
    %1370 = vmatpush2.bf16.msra.mxu0 0
    %1371 = vmatprep.subr.bf16.mxu0 0
    %1372 = vmatpush2.bf16.msra.mxu0 0
    %1373 = vmatprep.subr.bf16.mxu0 0
    %1374 = vmatpush2.bf16.msra.mxu0 0
    %1375 = vmatprep.subr.bf16.mxu0 0
    %1376 = vmatpush2.bf16.msra.mxu0 0
    %1377 = vmatprep.subr.bf16.mxu0 0
    %1378 = vmatpush2.bf16.msra.mxu0 0
    %1379 = vmatprep.subr.bf16.mxu0 0
    %1380 = vmatpush2.bf16.msra.mxu0 0
    %1381 = vmatprep.subr.bf16.mxu0 0
    %1382 = vmatpush2.bf16.msra.mxu0 0
    %1383 = vmatprep.mubr.bf16.mxu0 0
    %1384 = vmatmul.mubr.bf16.gmra.mxu0 %v138
    %v1385 = vpop.f32.mrf.mxu0
    %v1386 = vadd.f32 0.0, %v1385
    %v1387 = vpop.f32.mrf.mxu0
    %v1388 = vpop.f32.mrf.mxu0
    %v1389 = vadd.f32 0.0, %v1388
    %v1390 = vpop.f32.mrf.mxu0
    %1391 = vdwg.mxu0
    %1392 = vmatprep.subr.bf16.mxu0 0
    %1393 = vmatpush1.bf16.msra.mxu0 0
    %1394 = vmatprep.subr.bf16.mxu0 0
    %1395 = vmatpush1.bf16.msra.mxu0 0
    %1396 = vmatprep.subr.bf16.mxu0 0
    %1397 = vmatpush1.bf16.msra.mxu0 0
    %1398 = vmatprep.subr.bf16.mxu0 0
    %1399 = vmatpush1.bf16.msra.mxu0 0
    %1400 = vmatprep.subr.bf16.mxu0 0
    %1401 = vmatpush1.bf16.msra.mxu0 0
    %1402 = vmatprep.subr.bf16.mxu0 0
    %1403 = vmatpush1.bf16.msra.mxu0 0
    %1404 = vmatprep.subr.bf16.mxu0 0
    %1405 = vmatpush1.bf16.msra.mxu0 0
    %1406 = vmatprep.subr.bf16.mxu0 0
    %1407 = vmatpush1.bf16.msra.mxu0 %v1347
    %1408 = vmatprep.subr.bf16.mxu0 0
    %1409 = vmatpush2.bf16.msra.mxu0 0
    %1410 = vmatprep.subr.bf16.mxu0 0
    %1411 = vmatpush2.bf16.msra.mxu0 0
    %1412 = vmatprep.subr.bf16.mxu0 0
    %1413 = vmatpush2.bf16.msra.mxu0 0
    %1414 = vmatprep.subr.bf16.mxu0 0
    %1415 = vmatpush2.bf16.msra.mxu0 0
    %1416 = vmatprep.subr.bf16.mxu0 0
    %1417 = vmatpush2.bf16.msra.mxu0 0
    %1418 = vmatprep.subr.bf16.mxu0 0
    %1419 = vmatpush2.bf16.msra.mxu0 0
    %1420 = vmatprep.subr.bf16.mxu0 0
    %1421 = vmatpush2.bf16.msra.mxu0 0
    %1422 = vmatprep.subr.bf16.mxu0 0
    %1423 = vmatpush2.bf16.msra.mxu0 0
    %1424 = vmatprep.mubr.bf16.mxu0 0
    %1425 = vmatmul.mubr.bf16.gmra.mxu0 %v89
    %v1426 = vpop.f32.mrf.mxu0
    %v1427 = vadd.f32 %v1386, %v1426
    %v1428 = vpop.f32.mrf.mxu0
    %v1429 = vpop.f32.mrf.mxu0
    %v1430 = vadd.f32 %v1389, %v1429
    %v1431 = vpop.f32.mrf.mxu0
    %1432 = vdwg.mxu0
    %1433 = vst.msk [vmem:[#allocation2] sm:$0xff] %vm87, %v1427
    %1434 = vst.msk [vmem:[#allocation2 + $0x8] sm:$0xff] %vm87, %v1430
    %1435 = vmatprep.subr.bf16.mxu0 0
    %1436 = vmatpush1.bf16.msra.mxu0 0
    %1437 = vmatprep.subr.bf16.mxu0 0
    %1438 = vmatpush1.bf16.msra.mxu0 0
    %1439 = vmatprep.subr.bf16.mxu0 0
    %1440 = vmatpush1.bf16.msra.mxu0 0
    %1441 = vmatprep.subr.bf16.mxu0 0
    %1442 = vmatpush1.bf16.msra.mxu0 0
    %1443 = vmatprep.subr.bf16.mxu0 0
    %1444 = vmatpush1.bf16.msra.mxu0 0
    %1445 = vmatprep.subr.bf16.mxu0 0
    %1446 = vmatpush1.bf16.msra.mxu0 0
    %1447 = vmatprep.subr.bf16.mxu0 0
    %1448 = vmatpush1.bf16.msra.mxu0 0
    %1449 = vmatprep.subr.bf16.mxu0 0
    %1450 = vmatpush1.bf16.msra.mxu0 %v1350
    %1451 = vmatprep.subr.bf16.mxu0 0
    %1452 = vmatpush2.bf16.msra.mxu0 0
    %1453 = vmatprep.subr.bf16.mxu0 0
    %1454 = vmatpush2.bf16.msra.mxu0 0
    %1455 = vmatprep.subr.bf16.mxu0 0
    %1456 = vmatpush2.bf16.msra.mxu0 0
    %1457 = vmatprep.subr.bf16.mxu0 0
    %1458 = vmatpush2.bf16.msra.mxu0 0
    %1459 = vmatprep.subr.bf16.mxu0 0
    %1460 = vmatpush2.bf16.msra.mxu0 0
    %1461 = vmatprep.subr.bf16.mxu0 0
    %1462 = vmatpush2.bf16.msra.mxu0 0
    %1463 = vmatprep.subr.bf16.mxu0 0
    %1464 = vmatpush2.bf16.msra.mxu0 0
    %1465 = vmatprep.subr.bf16.mxu0 0
    %1466 = vmatpush2.bf16.msra.mxu0 0
    %1467 = vmatprep.mubr.bf16.mxu0 0
    %1468 = vmatmul.mubr.bf16.gmra.mxu0 %v89
    %v1469 = vpop.f32.mrf.mxu0
    %v1470 = vadd.f32 0.0, %v1469
    %v1471 = vpop.f32.mrf.mxu0
    %v1472 = vpop.f32.mrf.mxu0
    %v1473 = vadd.f32 0.0, %v1472
    %v1474 = vpop.f32.mrf.mxu0
    %1475 = vdwg.mxu0
    %1476 = vmatprep.subr.bf16.mxu0 0
    %1477 = vmatpush1.bf16.msra.mxu0 0
    %1478 = vmatprep.subr.bf16.mxu0 0
    %1479 = vmatpush1.bf16.msra.mxu0 0
    %1480 = vmatprep.subr.bf16.mxu0 0
    %1481 = vmatpush1.bf16.msra.mxu0 0
    %1482 = vmatprep.subr.bf16.mxu0 0
    %1483 = vmatpush1.bf16.msra.mxu0 0
    %1484 = vmatprep.subr.bf16.mxu0 0
    %1485 = vmatpush1.bf16.msra.mxu0 0
    %1486 = vmatprep.subr.bf16.mxu0 0
    %1487 = vmatpush1.bf16.msra.mxu0 0
    %1488 = vmatprep.subr.bf16.mxu0 0
    %1489 = vmatpush1.bf16.msra.mxu0 0
    %1490 = vmatprep.subr.bf16.mxu0 0
    %1491 = vmatpush1.bf16.msra.mxu0 %v1347
    %1492 = vmatprep.subr.bf16.mxu0 0
    %1493 = vmatpush2.bf16.msra.mxu0 0
    %1494 = vmatprep.subr.bf16.mxu0 0
    %1495 = vmatpush2.bf16.msra.mxu0 0
    %1496 = vmatprep.subr.bf16.mxu0 0
    %1497 = vmatpush2.bf16.msra.mxu0 0
    %1498 = vmatprep.subr.bf16.mxu0 0
    %1499 = vmatpush2.bf16.msra.mxu0 0
    %1500 = vmatprep.subr.bf16.mxu0 0
    %1501 = vmatpush2.bf16.msra.mxu0 0
    %1502 = vmatprep.subr.bf16.mxu0 0
    %1503 = vmatpush2.bf16.msra.mxu0 0
    %1504 = vmatprep.subr.bf16.mxu0 0
    %1505 = vmatpush2.bf16.msra.mxu0 0
    %1506 = vmatprep.subr.bf16.mxu0 0
    %1507 = vmatpush2.bf16.msra.mxu0 0
    %1508 = vmatprep.mubr.bf16.mxu0 0
    %1509 = vmatmul.mubr.bf16.gmra.mxu0 %v138
    %v1510 = vpop.f32.mrf.mxu0
    %v1511 = vadd.f32 0.0, %v1510
    %v1512 = vpop.f32.mrf.mxu0
    %v1513 = vpop.f32.mrf.mxu0
    %v1514 = vadd.f32 0.0, %v1513
    %v1515 = vpop.f32.mrf.mxu0
    %1516 = vdwg.mxu0
    %v1517 = vsub.f32 %v1470, %v1511
    %v1518 = vsub.f32 %v1473, %v1514
    %1519 = vst.msk [vmem:[#allocation2 + $0x10] sm:$0xff] %vm87, %v1517
    %1520 = vst.msk [vmem:[#allocation2 + $0x18] sm:$0xff] %vm87, %v1518
    %v1521 = vld [vmem:[#allocation2 + $0x20] sm:$0xff]
    %v1522 = vld [vmem:[#allocation2 + $0x28] sm:$0xff]
    %v1523 = vpack.c.bf16 %v1522, %v1521
    %v1524 = vld [vmem:[#allocation2 + $0x30] sm:$0xff]
    %v1525 = vld [vmem:[#allocation2 + $0x38] sm:$0xff]
    %v1526 = vpack.c.bf16 %v1525, %v1524
    %1527 = vmatprep.subr.bf16.mxu0 0
    %1528 = vmatpush1.bf16.msra.mxu0 0
    %1529 = vmatprep.subr.bf16.mxu0 0
    %1530 = vmatpush1.bf16.msra.mxu0 0
    %1531 = vmatprep.subr.bf16.mxu0 0
    %1532 = vmatpush1.bf16.msra.mxu0 0
    %1533 = vmatprep.subr.bf16.mxu0 0
    %1534 = vmatpush1.bf16.msra.mxu0 0
    %1535 = vmatprep.subr.bf16.mxu0 0
    %1536 = vmatpush1.bf16.msra.mxu0 0
    %1537 = vmatprep.subr.bf16.mxu0 0
    %1538 = vmatpush1.bf16.msra.mxu0 0
    %1539 = vmatprep.subr.bf16.mxu0 0
    %1540 = vmatpush1.bf16.msra.mxu0 0
    %1541 = vmatprep.subr.bf16.mxu0 0
    %1542 = vmatpush1.bf16.msra.mxu0 %v1526
    %1543 = vmatprep.subr.bf16.mxu0 0
    %1544 = vmatpush2.bf16.msra.mxu0 0
    %1545 = vmatprep.subr.bf16.mxu0 0
    %1546 = vmatpush2.bf16.msra.mxu0 0
    %1547 = vmatprep.subr.bf16.mxu0 0
    %1548 = vmatpush2.bf16.msra.mxu0 0
    %1549 = vmatprep.subr.bf16.mxu0 0
    %1550 = vmatpush2.bf16.msra.mxu0 0
    %1551 = vmatprep.subr.bf16.mxu0 0
    %1552 = vmatpush2.bf16.msra.mxu0 0
    %1553 = vmatprep.subr.bf16.mxu0 0
    %1554 = vmatpush2.bf16.msra.mxu0 0
    %1555 = vmatprep.subr.bf16.mxu0 0
    %1556 = vmatpush2.bf16.msra.mxu0 0
    %1557 = vmatprep.subr.bf16.mxu0 0
    %1558 = vmatpush2.bf16.msra.mxu0 0
    %1559 = vmatprep.mubr.bf16.mxu0 0
    %1560 = vmatmul.mubr.bf16.gmra.mxu0 %v138
    %v1561 = vpop.f32.mrf.mxu0
    %v1562 = vadd.f32 0.0, %v1561
    %v1563 = vpop.f32.mrf.mxu0
    %v1564 = vpop.f32.mrf.mxu0
    %v1565 = vadd.f32 0.0, %v1564
    %v1566 = vpop.f32.mrf.mxu0
    %1567 = vdwg.mxu0
    %1568 = vmatprep.subr.bf16.mxu0 0
    %1569 = vmatpush1.bf16.msra.mxu0 0
    %1570 = vmatprep.subr.bf16.mxu0 0
    %1571 = vmatpush1.bf16.msra.mxu0 0
    %1572 = vmatprep.subr.bf16.mxu0 0
    %1573 = vmatpush1.bf16.msra.mxu0 0
    %1574 = vmatprep.subr.bf16.mxu0 0
    %1575 = vmatpush1.bf16.msra.mxu0 0
    %1576 = vmatprep.subr.bf16.mxu0 0
    %1577 = vmatpush1.bf16.msra.mxu0 0
    %1578 = vmatprep.subr.bf16.mxu0 0
    %1579 = vmatpush1.bf16.msra.mxu0 0
    %1580 = vmatprep.subr.bf16.mxu0 0
    %1581 = vmatpush1.bf16.msra.mxu0 0
    %1582 = vmatprep.subr.bf16.mxu0 0
    %1583 = vmatpush1.bf16.msra.mxu0 %v1523
    %1584 = vmatprep.subr.bf16.mxu0 0
    %1585 = vmatpush2.bf16.msra.mxu0 0
    %1586 = vmatprep.subr.bf16.mxu0 0
    %1587 = vmatpush2.bf16.msra.mxu0 0
    %1588 = vmatprep.subr.bf16.mxu0 0
    %1589 = vmatpush2.bf16.msra.mxu0 0
    %1590 = vmatprep.subr.bf16.mxu0 0
    %1591 = vmatpush2.bf16.msra.mxu0 0
    %1592 = vmatprep.subr.bf16.mxu0 0
    %1593 = vmatpush2.bf16.msra.mxu0 0
    %1594 = vmatprep.subr.bf16.mxu0 0
    %1595 = vmatpush2.bf16.msra.mxu0 0
    %1596 = vmatprep.subr.bf16.mxu0 0
    %1597 = vmatpush2.bf16.msra.mxu0 0
    %1598 = vmatprep.subr.bf16.mxu0 0
    %1599 = vmatpush2.bf16.msra.mxu0 0
    %1600 = vmatprep.mubr.bf16.mxu0 0
    %1601 = vmatmul.mubr.bf16.gmra.mxu0 %v89
    %v1602 = vpop.f32.mrf.mxu0
    %v1603 = vadd.f32 %v1562, %v1602
    %v1604 = vpop.f32.mrf.mxu0
    %v1605 = vpop.f32.mrf.mxu0
    %v1606 = vadd.f32 %v1565, %v1605
    %v1607 = vpop.f32.mrf.mxu0
    %1608 = vdwg.mxu0
    %1609 = vst.msk [vmem:[#allocation2 + $0x20] sm:$0xff] %vm87, %v1603
    %1610 = vst.msk [vmem:[#allocation2 + $0x28] sm:$0xff] %vm87, %v1606
    %1611 = vmatprep.subr.bf16.mxu0 0
    %1612 = vmatpush1.bf16.msra.mxu0 0
    %1613 = vmatprep.subr.bf16.mxu0 0
    %1614 = vmatpush1.bf16.msra.mxu0 0
    %1615 = vmatprep.subr.bf16.mxu0 0
    %1616 = vmatpush1.bf16.msra.mxu0 0
    %1617 = vmatprep.subr.bf16.mxu0 0
    %1618 = vmatpush1.bf16.msra.mxu0 0
    %1619 = vmatprep.subr.bf16.mxu0 0
    %1620 = vmatpush1.bf16.msra.mxu0 0
    %1621 = vmatprep.subr.bf16.mxu0 0
    %1622 = vmatpush1.bf16.msra.mxu0 0
    %1623 = vmatprep.subr.bf16.mxu0 0
    %1624 = vmatpush1.bf16.msra.mxu0 0
    %1625 = vmatprep.subr.bf16.mxu0 0
    %1626 = vmatpush1.bf16.msra.mxu0 %v1526
    %1627 = vmatprep.subr.bf16.mxu0 0
    %1628 = vmatpush2.bf16.msra.mxu0 0
    %1629 = vmatprep.subr.bf16.mxu0 0
    %1630 = vmatpush2.bf16.msra.mxu0 0
    %1631 = vmatprep.subr.bf16.mxu0 0
    %1632 = vmatpush2.bf16.msra.mxu0 0
    %1633 = vmatprep.subr.bf16.mxu0 0
    %1634 = vmatpush2.bf16.msra.mxu0 0
    %1635 = vmatprep.subr.bf16.mxu0 0
    %1636 = vmatpush2.bf16.msra.mxu0 0
    %1637 = vmatprep.subr.bf16.mxu0 0
    %1638 = vmatpush2.bf16.msra.mxu0 0
    %1639 = vmatprep.subr.bf16.mxu0 0
    %1640 = vmatpush2.bf16.msra.mxu0 0
    %1641 = vmatprep.subr.bf16.mxu0 0
    %1642 = vmatpush2.bf16.msra.mxu0 0
    %1643 = vmatprep.mubr.bf16.mxu0 0
    %1644 = vmatmul.mubr.bf16.gmra.mxu0 %v89
    %v1645 = vpop.f32.mrf.mxu0
    %v1646 = vadd.f32 0.0, %v1645
    %v1647 = vpop.f32.mrf.mxu0
    %v1648 = vpop.f32.mrf.mxu0
    %v1649 = vadd.f32 0.0, %v1648
    %v1650 = vpop.f32.mrf.mxu0
    %1651 = vdwg.mxu0
    %1652 = vmatprep.subr.bf16.mxu0 0
    %1653 = vmatpush1.bf16.msra.mxu0 0
    %1654 = vmatprep.subr.bf16.mxu0 0
    %1655 = vmatpush1.bf16.msra.mxu0 0
    %1656 = vmatprep.subr.bf16.mxu0 0
    %1657 = vmatpush1.bf16.msra.mxu0 0
    %1658 = vmatprep.subr.bf16.mxu0 0
    %1659 = vmatpush1.bf16.msra.mxu0 0
    %1660 = vmatprep.subr.bf16.mxu0 0
    %1661 = vmatpush1.bf16.msra.mxu0 0
    %1662 = vmatprep.subr.bf16.mxu0 0
    %1663 = vmatpush1.bf16.msra.mxu0 0
    %1664 = vmatprep.subr.bf16.mxu0 0
    %1665 = vmatpush1.bf16.msra.mxu0 0
    %1666 = vmatprep.subr.bf16.mxu0 0
    %1667 = vmatpush1.bf16.msra.mxu0 %v1523
    %1668 = vmatprep.subr.bf16.mxu0 0
    %1669 = vmatpush2.bf16.msra.mxu0 0
    %1670 = vmatprep.subr.bf16.mxu0 0
    %1671 = vmatpush2.bf16.msra.mxu0 0
    %1672 = vmatprep.subr.bf16.mxu0 0
    %1673 = vmatpush2.bf16.msra.mxu0 0
    %1674 = vmatprep.subr.bf16.mxu0 0
    %1675 = vmatpush2.bf16.msra.mxu0 0
    %1676 = vmatprep.subr.bf16.mxu0 0
    %1677 = vmatpush2.bf16.msra.mxu0 0
    %1678 = vmatprep.subr.bf16.mxu0 0
    %1679 = vmatpush2.bf16.msra.mxu0 0
    %1680 = vmatprep.subr.bf16.mxu0 0
    %1681 = vmatpush2.bf16.msra.mxu0 0
    %1682 = vmatprep.subr.bf16.mxu0 0
    %1683 = vmatpush2.bf16.msra.mxu0 0
    %1684 = vmatprep.mubr.bf16.mxu0 0
    %1685 = vmatmul.mubr.bf16.gmra.mxu0 %v138
    %v1686 = vpop.f32.mrf.mxu0
    %v1687 = vadd.f32 0.0, %v1686
    %v1688 = vpop.f32.mrf.mxu0
    %v1689 = vpop.f32.mrf.mxu0
    %v1690 = vadd.f32 0.0, %v1689
    %v1691 = vpop.f32.mrf.mxu0
    %1692 = vdwg.mxu0
    %v1693 = vsub.f32 %v1646, %v1687
    %v1694 = vsub.f32 %v1649, %v1690
    %1695 = vst.msk [vmem:[#allocation2 + $0x30] sm:$0xff] %vm87, %v1693
    %1696 = vst.msk [vmem:[#allocation2 + $0x38] sm:$0xff] %vm87, %v1694
    %v1697 = vld [vmem:[#allocation2] sm:$0xff]
    %v1698 = vld [vmem:[#allocation2 + $0x8] sm:$0xff]
    %v1699 = vld [vmem:[#allocation2 + $0x10] sm:$0xff]
    %v1700 = vld [vmem:[#allocation2 + $0x18] sm:$0xff]
    %v1701 = vld [vmem:[#allocation2 + $0x20] sm:$0xff]
    %v1702 = vld [vmem:[#allocation2 + $0x28] sm:$0xff]
    %v1703 = vld [vmem:[#allocation2 + $0x30] sm:$0xff]
    %v1704 = vld [vmem:[#allocation2 + $0x38] sm:$0xff]
    %v1705 = vpack.c.bf16 %v1698, %v1697
    %v1706 = vpack.c.bf16 %v1700, %v1699
    %v1707 = vpack.c.bf16 %v1702, %v1701
    %v1708 = vpack.c.bf16 %v1704, %v1703
    %v1710 = vsel %vm87, %v1705, 0
    %v1713 = vsel %vm87, %v1706, 0
    %v1716 = vsel %vm87, %v1707, 0
    %v1719 = vsel %vm87, %v1708, 0
    %1721 = vmatprep.subr.bf16.mxu0 0
    %1722 = vmatpush1.bf16.msra.mxu0 0
    %1723 = vmatprep.subr.bf16.mxu0 0
    %1724 = vmatpush1.bf16.msra.mxu0 0
    %1725 = vmatprep.subr.bf16.mxu0 0
    %1726 = vmatpush1.bf16.msra.mxu0 0
    %1727 = vmatprep.subr.bf16.mxu0 0
    %1728 = vmatpush1.bf16.msra.mxu0 0
    %1729 = vmatprep.subr.bf16.mxu0 0
    %1730 = vmatpush1.bf16.msra.mxu0 0
    %1731 = vmatprep.subr.bf16.mxu0 0
    %1732 = vmatpush1.bf16.msra.mxu0 0
    %1733 = vmatprep.subr.bf16.mxu0 0
    %1734 = vmatpush1.bf16.msra.mxu0 0
    %1735 = vmatprep.subr.bf16.mxu0 0
    %1736 = vmatpush1.bf16.msra.mxu0 %v463
    %1737 = vmatprep.subr.bf16.mxu0 0
    %1738 = vmatpush2.bf16.msra.mxu0 0
    %1739 = vmatprep.subr.bf16.mxu0 0
    %1740 = vmatpush2.bf16.msra.mxu0 0
    %1741 = vmatprep.subr.bf16.mxu0 0
    %1742 = vmatpush2.bf16.msra.mxu0 0
    %1743 = vmatprep.subr.bf16.mxu0 0
    %1744 = vmatpush2.bf16.msra.mxu0 0
    %1745 = vmatprep.subr.bf16.mxu0 0
    %1746 = vmatpush2.bf16.msra.mxu0 0
    %1747 = vmatprep.subr.bf16.mxu0 0
    %1748 = vmatpush2.bf16.msra.mxu0 0
    %1749 = vmatprep.subr.bf16.mxu0 0
    %1750 = vmatpush2.bf16.msra.mxu0 0
    %1751 = vmatprep.subr.bf16.mxu0 0
    %1752 = vmatpush2.bf16.msra.mxu0 0
    %1753 = vmatprep.mubr.bf16.mxu0 0
    %1754 = vmatmul.mubr.bf16.gmra.mxu0 %v1710
    %v1755 = vpop.f32.mrf.mxu0
    %v1756 = vadd.f32 0.0, %v1755
    %v1757 = vpop.f32.mrf.mxu0
    %v1758 = vpop.f32.mrf.mxu0
    %v1759 = vadd.f32 0.0, %v1758
    %v1760 = vpop.f32.mrf.mxu0
    %1761 = vmatprep.mubr.bf16.mxu0 0
    %1762 = vmatmul.mubr.bf16.gmra.mxu0 %v1713
    %v1763 = vpop.f32.mrf.mxu0
    %v1764 = vadd.f32 0.0, %v1763
    %v1765 = vpop.f32.mrf.mxu0
    %v1766 = vpop.f32.mrf.mxu0
    %v1767 = vadd.f32 0.0, %v1766
    %v1768 = vpop.f32.mrf.mxu0
    %1769 = vmatprep.mubr.bf16.mxu0 0
    %1770 = vmatmul.mubr.bf16.gmra.mxu0 %v1716
    %v1771 = vpop.f32.mrf.mxu0
    %v1772 = vadd.f32 0.0, %v1771
    %v1773 = vpop.f32.mrf.mxu0
    %v1774 = vpop.f32.mrf.mxu0
    %v1775 = vadd.f32 0.0, %v1774
    %v1776 = vpop.f32.mrf.mxu0
    %1777 = vmatprep.mubr.bf16.mxu0 0
    %1778 = vmatmul.mubr.bf16.gmra.mxu0 %v1719
    %v1779 = vpop.f32.mrf.mxu0
    %v1780 = vadd.f32 0.0, %v1779
    %v1781 = vpop.f32.mrf.mxu0
    %v1782 = vpop.f32.mrf.mxu0
    %v1783 = vadd.f32 0.0, %v1782
    %v1784 = vpop.f32.mrf.mxu0
    %1785 = vdwg.mxu0
    %1786 = vmatprep.subr.bf16.mxu0 0
    %1787 = vmatpush1.bf16.msra.mxu0 0
    %1788 = vmatprep.subr.bf16.mxu0 0
    %1789 = vmatpush1.bf16.msra.mxu0 0
    %1790 = vmatprep.subr.bf16.mxu0 0
    %1791 = vmatpush1.bf16.msra.mxu0 0
    %1792 = vmatprep.subr.bf16.mxu0 0
    %1793 = vmatpush1.bf16.msra.mxu0 0
    %1794 = vmatprep.subr.bf16.mxu0 0
    %1795 = vmatpush1.bf16.msra.mxu0 0
    %1796 = vmatprep.subr.bf16.mxu0 0
    %1797 = vmatpush1.bf16.msra.mxu0 0
    %1798 = vmatprep.subr.bf16.mxu0 0
    %1799 = vmatpush1.bf16.msra.mxu0 0
    %1800 = vmatprep.subr.bf16.mxu0 0
    %1801 = vmatpush1.bf16.msra.mxu0 %v546
    %1802 = vmatprep.subr.bf16.mxu0 0
    %1803 = vmatpush2.bf16.msra.mxu0 0
    %1804 = vmatprep.subr.bf16.mxu0 0
    %1805 = vmatpush2.bf16.msra.mxu0 0
    %1806 = vmatprep.subr.bf16.mxu0 0
    %1807 = vmatpush2.bf16.msra.mxu0 0
    %1808 = vmatprep.subr.bf16.mxu0 0
    %1809 = vmatpush2.bf16.msra.mxu0 0
    %1810 = vmatprep.subr.bf16.mxu0 0
    %1811 = vmatpush2.bf16.msra.mxu0 0
    %1812 = vmatprep.subr.bf16.mxu0 0
    %1813 = vmatpush2.bf16.msra.mxu0 0
    %1814 = vmatprep.subr.bf16.mxu0 0
    %1815 = vmatpush2.bf16.msra.mxu0 0
    %1816 = vmatprep.subr.bf16.mxu0 0
    %1817 = vmatpush2.bf16.msra.mxu0 0
    %1818 = vmatprep.mubr.bf16.mxu0 0
    %1819 = vmatmul.mubr.bf16.gmra.mxu0 %v1710
    %v1820 = vpop.f32.mrf.mxu0
    %v1821 = vadd.f32 0.0, %v1820
    %v1822 = vpop.f32.mrf.mxu0
    %v1823 = vpop.f32.mrf.mxu0
    %v1824 = vadd.f32 0.0, %v1823
    %v1825 = vpop.f32.mrf.mxu0
    %1826 = vmatprep.mubr.bf16.mxu0 0
    %1827 = vmatmul.mubr.bf16.gmra.mxu0 %v1713
    %v1828 = vpop.f32.mrf.mxu0
    %v1829 = vadd.f32 0.0, %v1828
    %v1830 = vpop.f32.mrf.mxu0
    %v1831 = vpop.f32.mrf.mxu0
    %v1832 = vadd.f32 0.0, %v1831
    %v1833 = vpop.f32.mrf.mxu0
    %1834 = vmatprep.mubr.bf16.mxu0 0
    %1835 = vmatmul.mubr.bf16.gmra.mxu0 %v1716
    %v1836 = vpop.f32.mrf.mxu0
    %v1837 = vadd.f32 0.0, %v1836
    %v1838 = vpop.f32.mrf.mxu0
    %v1839 = vpop.f32.mrf.mxu0
    %v1840 = vadd.f32 0.0, %v1839
    %v1841 = vpop.f32.mrf.mxu0
    %1842 = vmatprep.mubr.bf16.mxu0 0
    %1843 = vmatmul.mubr.bf16.gmra.mxu0 %v1719
    %v1844 = vpop.f32.mrf.mxu0
    %v1845 = vadd.f32 0.0, %v1844
    %v1846 = vpop.f32.mrf.mxu0
    %v1847 = vpop.f32.mrf.mxu0
    %v1848 = vadd.f32 0.0, %v1847
    %v1849 = vpop.f32.mrf.mxu0
    %1850 = vdwg.mxu0
    %v1851 = vadd.f32 %v1756, %v1829
    %v1852 = vadd.f32 %v1759, %v1832
    %1853 = vst.msk [vmem:[#allocation10] sm:$0xff] %vm87, %v1851
    %1854 = vst.msk [vmem:[#allocation10 + $0x8] sm:$0xff] %vm87, %v1852
    %v1855 = vsub.f32 %v1764, %v1821
    %v1856 = vsub.f32 %v1767, %v1824
    %s1857 = scalar_lea.vmem [#allocation10], 16
    %1858 = vst.msk [vmem:[%s1857] sm:$0xff] %vm87, %v1855
    %1859 = vst.msk [vmem:[%s1857 + $0x8] sm:$0xff] %vm87, %v1856
    %v1860 = vadd.f32 %v1772, %v1845
    %v1861 = vadd.f32 %v1775, %v1848
    %s1862 = scalar_lea.vmem [#allocation10], 32
    %1863 = vst.msk [vmem:[%s1862] sm:$0xff] %vm87, %v1860
    %1864 = vst.msk [vmem:[%s1862 + $0x8] sm:$0xff] %vm87, %v1861
    %v1865 = vsub.f32 %v1780, %v1837
    %v1866 = vsub.f32 %v1783, %v1840
    %s1867 = scalar_lea.vmem [#allocation10], 48
    %1868 = vst.msk [vmem:[%s1867] sm:$0xff] %vm87, %v1865
    %1869 = vst.msk [vmem:[%s1867 + $0x8] sm:$0xff] %vm87, %v1866
    // Predicated region
    $region42: #{fft_nn_wrapper.1} parent=1 // pred_check
      _
    $region43: #{fft_nn_wrapper.1} parent=1 // pred_check_branch
      %1871 = sbr.rel (0) target = $region45
    $region44: #{fft_nn_wrapper.1} parent=1 // pred_region
      %s1873 = ssub.s32 1024, 1024
      %1874 = vsyncadd [#allocation5], %s1873
      %s1875 = sshll.u32 [#allocation10], 4
      %s1876 = int_to_ptr.vmem [resolvable:$true] %s1875
      %1881 = dma.vmem_to_hbm [thread:$0]  %s1876, 1024, %s7, [#allocation5], 128, 128, 8
    $region45: #{fft_nn_wrapper.1} parent=1 // pred_fallthru
      _
    // Predicated region
    $region46: #{fft_nn_wrapper.1} parent=1 // pred_check
      _
    $region47: #{fft_nn_wrapper.1} parent=1 // pred_check_branch
      %1883 = sbr.rel (0) target = $region49
    $region48: #{fft_nn_wrapper.1} parent=1 // pred_region
      %1884 = dma.done [#allocation5], 1024
    $region49: #{fft_nn_wrapper.1} parent=1 // pred_fallthru
      _
    %1885 = vsyncpa [#allocation4], 1
    %1886 = vsyncpa [#allocation5], 1
    %1887 = vsyncpa [#allocation6], 1
    %1888 = vsyncpa [#allocation9], 1

</llo_original>
